<compile_context>
chip_gen: v5e
topology: v5e:2x2
jax: 0.10.0
libtpu: 0.0.40
codegen_flags: <defaults>
</compile_context>

<pallas_src>
import functools
import math

import jax
import jax.numpy as jnp
from jax.experimental import pallas as pl
from jax.experimental.pallas import tpu as pltpu


# ----------------------------- in-kernel helpers -----------------------------

def _layernorm(x, eps=1e-6):
    # LayerNorm over last dim, no affine (nn.LayerNorm(elementwise_affine=False)).
    mu = jnp.mean(x, axis=-1, keepdims=True)
    xc = x - mu
    var = jnp.mean(xc * xc, axis=-1, keepdims=True)
    return xc * jax.lax.rsqrt(var + eps)


def _gelu_tanh(x):
    # GELU(approximate='tanh')
    c = math.sqrt(2.0 / math.pi)
    return 0.5 * x * (1.0 + jnp.tanh(c * (x + 0.044715 * x * x * x)))


# --------------------------------- kernel ------------------------------------

def pixart_block_kernel(
    # inputs
    x_tile_ref, x_full_ref, y_ref, t_ref, sst_ref,
    wq_s_ref, wkv_s_ref, wo_s_ref, bq_s_ref, bkv_s_ref, bo_s_ref,
    wq_c_ref, wkv_c_ref, wo_c_ref, bq_c_ref, bkv_c_ref, bo_c_ref,
    w1_ref, b1_ref, w2_ref, b2_ref,
    # output
    out_ref,
    # scratch (persistent across grid steps; per-batch K/V cache, head-major bf16)
    ks_ref, vs_ref, kc_ref, vc_ref,
    *, num_heads,
):
    C = x_tile_ref.shape[-1]
    H = num_heads
    d = C // H
    scale = 1.0 / math.sqrt(d)

    # adaLN-Zero modulation rows (hoisted once; each is (1, C) f32).
    mod = sst_ref[...] + t_ref[0]                      # (6, C)
    shift_msa, scale1p_msa, gate_msa = mod[0:1], 1.0 + mod[1:2], mod[2:3]
    shift_mlp, scale1p_mlp, gate_mlp = mod[3:4], 1.0 + mod[4:5], mod[5:6]

    def to_heads(z):
        # (L, C) -> (H, L, d): static lane slices + major-axis stack.
        return jnp.stack([z[:, h * d:(h + 1) * d] for h in range(H)], axis=0)

    def from_heads(z):
        # (H, L, d) -> (L, C)
        return jnp.concatenate([z[h] for h in range(H)], axis=-1)

    def head_attention(q_heads, k_heads, v_heads):
        # q: (H, Tq, d) bf16; k/v: (H, L, d) bf16. f32 softmax, bf16 PV matmul feed.
        s = jnp.einsum("hqd,hkd->hqk", q_heads, k_heads,
                       preferred_element_type=jnp.float32) * scale
        s = s - jnp.max(s, axis=-1, keepdims=True)
        p = jnp.exp(s)
        p = p * pl.reciprocal(jnp.sum(p, axis=-1, keepdims=True), approx=True)
        return jnp.einsum("hqk,hkd->hqd", p.astype(jnp.bfloat16), v_heads,
                          preferred_element_type=jnp.float32)

    # ---- once per batch: fused K/V projections into head-major bf16 scratch ----
    @pl.when(pl.program_id(1) == 0)
    def _precompute_kv():
        xf = x_full_ref[0].astype(jnp.float32)                       # (N, C)
        xmf = _layernorm(xf) * scale1p_msa + shift_msa
        kv_s = jnp.dot(xmf.astype(jnp.bfloat16), wkv_s_ref[...],
                       preferred_element_type=jnp.float32) + bkv_s_ref[...]
        ks_ref[...] = to_heads(kv_s[:, :C]).astype(jnp.bfloat16)
        vs_ref[...] = to_heads(kv_s[:, C:]).astype(jnp.bfloat16)

        kv_c = jnp.dot(y_ref[0].astype(jnp.bfloat16), wkv_c_ref[...],
                       preferred_element_type=jnp.float32) + bkv_c_ref[...]
        kc_ref[...] = to_heads(kv_c[:, :C]).astype(jnp.bfloat16)
        vc_ref[...] = to_heads(kv_c[:, C:]).astype(jnp.bfloat16)

    x0 = x_tile_ref[0].astype(jnp.float32)                           # (Tq, C)

    # ---- self-attention: x = x + gate_msa * attn(modulate(norm1(x))) ----
    xm = _layernorm(x0) * scale1p_msa + shift_msa
    q = jnp.dot(xm.astype(jnp.bfloat16), wq_s_ref[...],
                preferred_element_type=jnp.float32) + bq_s_ref[...]
    # TODO(synk): for very large N add online-softmax kv tiling (flash-style).
    o = head_attention(to_heads(q).astype(jnp.bfloat16), ks_ref[...], vs_ref[...])
    a = jnp.dot(from_heads(o).astype(jnp.bfloat16), wo_s_ref[...],
                preferred_element_type=jnp.float32) + bo_s_ref[...]
    x1 = x0 + gate_msa * a

    # ---- cross-attention: x = x + cross_attn(x, y) ----
    # TODO(synk): context key-padding `mask` not implemented (mask=None path only).
    qc = jnp.dot(x1.astype(jnp.bfloat16), wq_c_ref[...],
                 preferred_element_type=jnp.float32) + bq_c_ref[...]
    oc = head_attention(to_heads(qc).astype(jnp.bfloat16), kc_ref[...], vc_ref[...])
    ca = jnp.dot(from_heads(oc).astype(jnp.bfloat16), wo_c_ref[...],
                 preferred_element_type=jnp.float32) + bo_c_ref[...]
    x2 = x1 + ca

    # ---- MLP: x = x + gate_mlp * mlp(modulate(norm2(x))) ----
    xm2 = _layernorm(x2) * scale1p_mlp + shift_mlp
    h = _gelu_tanh(jnp.dot(xm2.astype(jnp.bfloat16), w1_ref[...],
                           preferred_element_type=jnp.float32) + b1_ref[...])
    m = jnp.dot(h.astype(jnp.bfloat16), w2_ref[...],
                preferred_element_type=jnp.float32) + b2_ref[...]
    x3 = x2 + gate_mlp * m

    out_ref[0] = x3.astype(out_ref.dtype)


# -------------------------------- wrapper ------------------------------------

def pixart_block(x, y, t, params, *, num_heads, q_tile=None):
    B, N, C = x.shape
    M = y.shape[1]
    Ch = params["w1"].shape[1]
    H = num_heads
    assert C % H == 0
    d = C // H
    t6 = t.reshape(B, 6, C).astype(jnp.float32)

    if q_tile is None or q_tile >= N:
        q_tile = N
    assert N % q_tile == 0 and (q_tile == N or q_tile % 8 == 0)
    n_tiles = N // q_tile

    def shared(shape):
        # Grid-invariant (weights / biases): constant index_map -> stays resident.
        return pl.BlockSpec(shape, lambda b, n: (0,) * len(shape))

    in_specs = [
        pl.BlockSpec((1, q_tile, C), lambda b, n: (b, n, 0)),   # x (q tile)
        pl.BlockSpec((1, N, C), lambda b, n: (b, 0, 0)),        # x (full, K/V source)
        pl.BlockSpec((1, M, C), lambda b, n: (b, 0, 0)),        # y (context)
        pl.BlockSpec((1, 6, C), lambda b, n: (b, 0, 0)),        # t (reshaped)
        shared((6, C)),                                          # scale_shift_table
        shared((C, C)), shared((C, 2 * C)), shared((C, C)),      # self-attn W (q, kv, o)
        shared((1, C)), shared((1, 2 * C)), shared((1, C)),      # self-attn b
        shared((C, C)), shared((C, 2 * C)), shared((C, C)),      # cross-attn W
        shared((1, C)), shared((1, 2 * C)), shared((1, C)),      # cross-attn b
        shared((C, Ch)), shared((1, Ch)), shared((Ch, C)), shared((1, C)),  # MLP
    ]
    out_specs = pl.BlockSpec((1, q_tile, C), lambda b, n: (b, n, 0))

    scratch_shapes = [
        pltpu.VMEM((H, N, d), jnp.bfloat16),   # self-attn K (head-major)
        pltpu.VMEM((H, N, d), jnp.bfloat16),   # self-attn V
        pltpu.VMEM((H, M, d), jnp.bfloat16),   # cross-attn K
        pltpu.VMEM((H, M, d), jnp.bfloat16),   # cross-attn V
    ]

    # Scoped-VMEM budget: double-buffered weights + f32 per-tile activations +
    # bf16 K/V scratch, clamped to a range safe on v5e/v6e/v7x.
    weight_bytes = sum(int(v.size) * v.dtype.itemsize for v in params.values())
    act_bytes = 4 * (N * C + M * C + q_tile * (4 * C + Ch) + H * q_tile * (N + M))
    kv_bytes = 2 * 2 * C * (N + M)
    vmem_limit = int(min(max(2 * weight_bytes + 4 * act_bytes + kv_bytes, 32 << 20),
                         96 << 20))

    kernel = functools.partial(pixart_block_kernel, num_heads=num_heads)

    return pl.pallas_call(
        kernel,
        grid_spec=pltpu.PrefetchScalarGridSpec(
            num_scalar_prefetch=0,
            grid=(B, n_tiles),
            in_specs=in_specs,
            out_specs=out_specs,
            scratch_shapes=scratch_shapes,
        ),
        out_shape=jax.ShapeDtypeStruct((B, N, C), x.dtype),
        compiler_params=pltpu.CompilerParams(
            dimension_semantics=("parallel", "arbitrary"),
            vmem_limit_bytes=vmem_limit,
        ),
    )(
        x, x, y, t6,
        params["scale_shift_table"],
        params["wq_s"], params["wkv_s"], params["wo_s"],
        params["bq_s"], params["bkv_s"], params["bo_s"],
        params["wq_c"], params["wkv_c"], params["wo_c"],
        params["bq_c"], params["bkv_c"], params["bo_c"],
        params["w1"], params["b1"], params["w2"], params["b2"],
    )


# ----------------------------- param construction ----------------------------

def init_params(key, hidden_size, mlp_ratio=4.0):
    C = hidden_size
    Ch = int(C * mlp_ratio)
    ks = jax.random.split(key, 17)
    wgen = lambda k, shape, s=0.02: (s * jax.random.normal(k, shape)).astype(jnp.bfloat16)
    bgen = lambda k, shape, s=0.02: (s * jax.random.normal(k, shape)).astype(jnp.float32)
    return {
        "scale_shift_table": (jax.random.normal(ks[0], (6, C)) / math.sqrt(C)).astype(jnp.float32),
        # self-attention (k/v fused into one (C, 2C) projection)
        "wq_s": wgen(ks[1], (C, C)), "wkv_s": wgen(ks[2], (C, 2 * C)), "wo_s": wgen(ks[3], (C, C)),
        "bq_s": bgen(ks[4], (1, C)), "bkv_s": bgen(ks[5], (1, 2 * C)), "bo_s": bgen(ks[6], (1, C)),
        # cross-attention (context_dim == hidden_size, k/v fused)
        "wq_c": wgen(ks[7], (C, C)), "wkv_c": wgen(ks[8], (C, 2 * C)), "wo_c": wgen(ks[9], (C, C)),
        "bq_c": bgen(ks[10], (1, C)), "bkv_c": bgen(ks[11], (1, 2 * C)), "bo_c": bgen(ks[12], (1, C)),
        # MLP
        "w1": wgen(ks[13], (C, Ch)), "b1": bgen(ks[14], (1, Ch)),
        "w2": wgen(ks[15], (Ch, C)), "b2": bgen(ks[16], (1, C)),
    }


# ------------------------- pure-JAX f32 reference -----------------------------

def pixart_block_reference(x, y, t, params, *, num_heads):
    B, N, C = x.shape
    H = num_heads
    d = C // H
    p = {k: v.astype(jnp.float32) for k, v in params.items()}

    def ln(z):
        mu = jnp.mean(z, -1, keepdims=True)
        var = jnp.mean((z - mu) ** 2, -1, keepdims=True)
        return (z - mu) * jax.lax.rsqrt(var + 1e-6)

    def heads(z):
        Bz, L, _ = z.shape
        return jnp.transpose(z.reshape(Bz, L, H, d), (0, 2, 1, 3))

    def attn(q, k, v):
        s = jnp.einsum("bhqd,bhkd->bhqk", heads(q), heads(k)) / math.sqrt(d)
        pr = jax.nn.softmax(s, axis=-1)
        o = jnp.einsum("bhqk,bhkd->bhqd", pr, heads(v))
        return jnp.transpose(o, (0, 2, 1, 3)).reshape(q.shape)

    mod = p["scale_shift_table"][None] + t.reshape(B, 6, C)
    sh_msa, sc_msa, g_msa, sh_mlp, sc_mlp, g_mlp = [mod[:, i:i + 1] for i in range(6)]

    xm = ln(x) * (1 + sc_msa) + sh_msa
    kv = xm @ p["wkv_s"] + p["bkv_s"]
    a = attn(xm @ p["wq_s"] + p["bq_s"], kv[..., :C], kv[..., C:]) @ p["wo_s"] + p["bo_s"]
    x = x + g_msa * a

    kvc = y @ p["wkv_c"] + p["bkv_c"]
    ca = attn(x @ p["wq_c"] + p["bq_c"], kvc[..., :C], kvc[..., C:]) @ p["wo_c"] + p["bo_c"]
    x = x + ca

    xm2 = ln(x) * (1 + sc_mlp) + sh_mlp
    h = xm2 @ p["w1"] + p["b1"]
    h = 0.5 * h * (1.0 + jnp.tanh(math.sqrt(2.0 / math.pi) * (h + 0.044715 * h ** 3)))
    x = x + g_mlp * (h @ p["w2"] + p["b2"])
    return x


# ----------------------------------- main ------------------------------------

if __name__ == "__main__":
    B, N, M, C = 2, 16, 8, 32
    num_heads = 4

    key = jax.random.PRNGKey(0)
    kx, ky, kt, kp = jax.random.split(key, 4)

    x = jax.random.normal(kx, (B, N, C), dtype=jnp.float32)   # image tokens
    y = jax.random.normal(ky, (B, M, C), dtype=jnp.float32)   # context tokens
    t = jax.random.normal(kt, (B, 6 * C), dtype=jnp.float32)  # adaLN conditioning

    params = init_params(kp, C, mlp_ratio=4.0)

    out = pixart_block(x, y, t, params, num_heads=num_heads, q_tile=8)
    jax.block_until_ready(out)
    assert out.shape == (B, N, C)

    ref = pixart_block_reference(x, y, t, params, num_heads=num_heads)
    max_err = float(jnp.max(jnp.abs(out - ref)))
    assert max_err < 5e-2, f"max abs error vs f32 reference: {max_err}"
    print("KERNEL_OK")
</pallas_src>

<mosaic_0001>
module attributes {stable_mosaic.version = 11 : i64} {
  func.func @pixart_block_kernel(%arg0: i32, %arg1: i32, %arg2: memref<1x8x32xf32, #tpu.memory_space<vmem>>, %arg3: memref<1x16x32xf32, #tpu.memory_space<vmem>>, %arg4: memref<1x8x32xf32, #tpu.memory_space<vmem>>, %arg5: memref<1x6x32xf32, #tpu.memory_space<vmem>>, %arg6: memref<6x32xf32, #tpu.memory_space<vmem>>, %arg7: memref<32x32xbf16, #tpu.memory_space<vmem>>, %arg8: memref<32x64xbf16, #tpu.memory_space<vmem>>, %arg9: memref<32x32xbf16, #tpu.memory_space<vmem>>, %arg10: memref<1x32xf32, #tpu.memory_space<vmem>>, %arg11: memref<1x64xf32, #tpu.memory_space<vmem>>, %arg12: memref<1x32xf32, #tpu.memory_space<vmem>>, %arg13: memref<32x32xbf16, #tpu.memory_space<vmem>>, %arg14: memref<32x64xbf16, #tpu.memory_space<vmem>>, %arg15: memref<32x32xbf16, #tpu.memory_space<vmem>>, %arg16: memref<1x32xf32, #tpu.memory_space<vmem>>, %arg17: memref<1x64xf32, #tpu.memory_space<vmem>>, %arg18: memref<1x32xf32, #tpu.memory_space<vmem>>, %arg19: memref<32x128xbf16, #tpu.memory_space<vmem>>, %arg20: memref<1x128xf32, #tpu.memory_space<vmem>>, %arg21: memref<128x32xbf16, #tpu.memory_space<vmem>>, %arg22: memref<1x32xf32, #tpu.memory_space<vmem>>, %arg23: memref<1x8x32xf32, #tpu.memory_space<vmem>>, %arg24: memref<4x16x8xbf16, #tpu.memory_space<vmem>>, %arg25: memref<4x16x8xbf16, #tpu.memory_space<vmem>>, %arg26: memref<4x8x8xbf16, #tpu.memory_space<vmem>>, %arg27: memref<4x8x8xbf16, #tpu.memory_space<vmem>>) attributes {dimension_semantics = [#tpu.dimension_semantics<parallel>, #tpu.dimension_semantics<arbitrary>], iteration_bounds = array<i64: 2, 2>, scalar_prefetch = 0 : i64, scratch_operands = 4 : i64, tpu.core_type = #tpu.core_type<tc>, window_params = [{transform_indices = @transform_0, window_bounds = array<i64: 1, 8, 32>}, {transform_indices = @transform_1, window_bounds = array<i64: 1, 16, 32>}, {transform_indices = @transform_2, window_bounds = array<i64: 1, 8, 32>}, {transform_indices = @transform_3, window_bounds = array<i64: 1, 6, 32>}, {pipeline_mode = #tpu.pipeline_mode<synchronous>, transform_indices = @transform_4, window_bounds = array<i64: 6, 32>}, {pipeline_mode = #tpu.pipeline_mode<synchronous>, transform_indices = @transform_5, window_bounds = array<i64: 32, 32>}, {pipeline_mode = #tpu.pipeline_mode<synchronous>, transform_indices = @transform_6, window_bounds = array<i64: 32, 64>}, {pipeline_mode = #tpu.pipeline_mode<synchronous>, transform_indices = @transform_7, window_bounds = array<i64: 32, 32>}, {pipeline_mode = #tpu.pipeline_mode<synchronous>, transform_indices = @transform_8, window_bounds = array<i64: 1, 32>}, {pipeline_mode = #tpu.pipeline_mode<synchronous>, transform_indices = @transform_9, window_bounds = array<i64: 1, 64>}, {pipeline_mode = #tpu.pipeline_mode<synchronous>, transform_indices = @transform_10, window_bounds = array<i64: 1, 32>}, {pipeline_mode = #tpu.pipeline_mode<synchronous>, transform_indices = @transform_11, window_bounds = array<i64: 32, 32>}, {pipeline_mode = #tpu.pipeline_mode<synchronous>, transform_indices = @transform_12, window_bounds = array<i64: 32, 64>}, {pipeline_mode = #tpu.pipeline_mode<synchronous>, transform_indices = @transform_13, window_bounds = array<i64: 32, 32>}, {pipeline_mode = #tpu.pipeline_mode<synchronous>, transform_indices = @transform_14, window_bounds = array<i64: 1, 32>}, {pipeline_mode = #tpu.pipeline_mode<synchronous>, transform_indices = @transform_15, window_bounds = array<i64: 1, 64>}, {pipeline_mode = #tpu.pipeline_mode<synchronous>, transform_indices = @transform_16, window_bounds = array<i64: 1, 32>}, {pipeline_mode = #tpu.pipeline_mode<synchronous>, transform_indices = @transform_17, window_bounds = array<i64: 32, 128>}, {pipeline_mode = #tpu.pipeline_mode<synchronous>, transform_indices = @transform_18, window_bounds = array<i64: 1, 128>}, {pipeline_mode = #tpu.pipeline_mode<synchronous>, transform_indices = @transform_19, window_bounds = array<i64: 128, 32>}, {pipeline_mode = #tpu.pipeline_mode<synchronous>, transform_indices = @transform_20, window_bounds = array<i64: 1, 32>}, {transform_indices = @transform_21, window_bounds = array<i64: 1, 8, 32>}]} {
    %c0 = arith.constant 0 : index
    %c0_0 = arith.constant 0 : index
    %0 = vector.load %arg6[%c0, %c0_0] : memref<6x32xf32, #tpu.memory_space<vmem>>, vector<6x32xf32>
    %c0_1 = arith.constant 0 : index
    %c0_2 = arith.constant 0 : index
    %c0_3 = arith.constant 0 : index
    %1 = vector.load %arg5[%c0_1, %c0_2, %c0_3] : memref<1x6x32xf32, #tpu.memory_space<vmem>>, vector<1x6x32xf32>
    %2 = vector.shape_cast %1 : vector<1x6x32xf32> to vector<6x32xf32>
    %3 = arith.addf %0, %2 : vector<6x32xf32>
    %4 = vector.extract_strided_slice %3 {offsets = [0, 0], sizes = [1, 32], strides = [1, 1]} : vector<6x32xf32> to vector<1x32xf32>
    %5 = vector.extract_strided_slice %3 {offsets = [1, 0], sizes = [1, 32], strides = [1, 1]} : vector<6x32xf32> to vector<1x32xf32>
    %cst = arith.constant 1.000000e+00 : f32
    %6 = vector.broadcast %cst : f32 to vector<1x32xf32>
    %7 = arith.addf %6, %5 : vector<1x32xf32>
    %8 = vector.extract_strided_slice %3 {offsets = [2, 0], sizes = [1, 32], strides = [1, 1]} : vector<6x32xf32> to vector<1x32xf32>
    %9 = vector.extract_strided_slice %3 {offsets = [3, 0], sizes = [1, 32], strides = [1, 1]} : vector<6x32xf32> to vector<1x32xf32>
    %10 = vector.extract_strided_slice %3 {offsets = [4, 0], sizes = [1, 32], strides = [1, 1]} : vector<6x32xf32> to vector<1x32xf32>
    %cst_4 = arith.constant 1.000000e+00 : f32
    %11 = vector.broadcast %cst_4 : f32 to vector<1x32xf32>
    %12 = arith.addf %11, %10 : vector<1x32xf32>
    %13 = vector.extract_strided_slice %3 {offsets = [5, 0], sizes = [1, 32], strides = [1, 1]} : vector<6x32xf32> to vector<1x32xf32>
    %c0_i32 = arith.constant 0 : i32
    %14 = arith.cmpi eq, %arg1, %c0_i32 : i32
    %15 = arith.extui %14 : i1 to i32
    %c0_i32_5 = arith.constant 0 : i32
    %16 = arith.cmpi ne, %15, %c0_i32_5 : i32
    scf.if %16 {
      %c0_78 = arith.constant 0 : index
      %c0_79 = arith.constant 0 : index
      %c0_80 = arith.constant 0 : index
      %190 = vector.load %arg3[%c0_78, %c0_79, %c0_80] : memref<1x16x32xf32, #tpu.memory_space<vmem>>, vector<1x16x32xf32>
      %191 = vector.shape_cast %190 : vector<1x16x32xf32> to vector<16x32xf32>
      %cst_81 = arith.constant dense<0.000000e+00> : vector<16xf32>
      %192 = vector.multi_reduction <add>, %191, %cst_81 [1] : vector<16x32xf32> to vector<16xf32>
      %193 = vector.shape_cast %192 : vector<16xf32> to vector<16x1xf32>
      %cst_82 = arith.constant 3.200000e+01 : f32
      %194 = vector.broadcast %cst_82 : f32 to vector<16x1xf32>
      %195 = arith.divf %193, %194 : vector<16x1xf32>
      %196 = vector.broadcast %195 : vector<16x1xf32> to vector<16x32xf32>
      %197 = arith.subf %191, %196 : vector<16x32xf32>
      %198 = arith.mulf %197, %197 : vector<16x32xf32>
      %cst_83 = arith.constant dense<0.000000e+00> : vector<16xf32>
      %199 = vector.multi_reduction <add>, %198, %cst_83 [1] : vector<16x32xf32> to vector<16xf32>
      %200 = vector.shape_cast %199 : vector<16xf32> to vector<16x1xf32>
      %cst_84 = arith.constant 3.200000e+01 : f32
      %201 = vector.broadcast %cst_84 : f32 to vector<16x1xf32>
      %202 = arith.divf %200, %201 : vector<16x1xf32>
      %cst_85 = arith.constant 9.99999997E-7 : f32
      %203 = vector.broadcast %cst_85 : f32 to vector<16x1xf32>
      %204 = arith.addf %202, %203 : vector<16x1xf32>
      %205 = math.rsqrt %204 : vector<16x1xf32>
      %206 = vector.broadcast %205 : vector<16x1xf32> to vector<16x32xf32>
      %207 = arith.mulf %197, %206 : vector<16x32xf32>
      %208 = vector.broadcast %7 : vector<1x32xf32> to vector<16x32xf32>
      %209 = arith.mulf %207, %208 : vector<16x32xf32>
      %210 = vector.broadcast %4 : vector<1x32xf32> to vector<16x32xf32>
      %211 = arith.addf %209, %210 : vector<16x32xf32>
      %212 = arith.truncf %211 : vector<16x32xf32> to vector<16x32xbf16>
      %c0_86 = arith.constant 0 : index
      %c0_87 = arith.constant 0 : index
      %213 = vector.load %arg8[%c0_86, %c0_87] : memref<32x64xbf16, #tpu.memory_space<vmem>>, vector<32x64xbf16>
      %cst_88 = arith.constant dense<0.000000e+00> : vector<16x64xf32>
      %214 = tpu.matmul %212, %213, %cst_88 {dimension_numbers = #tpu.dot_dimension_numbers<[1], [0], [0], [1], [0, 0, 1, 1], [], []>} : vector<16x32xbf16>, vector<32x64xbf16>, vector<16x64xf32> -> vector<16x64xf32>
      %c0_89 = arith.constant 0 : index
      %c0_90 = arith.constant 0 : index
      %215 = vector.load %arg11[%c0_89, %c0_90] : memref<1x64xf32, #tpu.memory_space<vmem>>, vector<1x64xf32>
      %216 = vector.broadcast %215 : vector<1x64xf32> to vector<16x64xf32>
      %217 = arith.addf %214, %216 : vector<16x64xf32>
      %218 = vector.extract_strided_slice %217 {offsets = [0, 0], sizes = [16, 32], strides = [1, 1]} : vector<16x64xf32> to vector<16x32xf32>
      %219 = vector.extract_strided_slice %218 {offsets = [0, 0], sizes = [16, 8], strides = [1, 1]} : vector<16x32xf32> to vector<16x8xf32>
      %220 = vector.extract_strided_slice %218 {offsets = [0, 8], sizes = [16, 8], strides = [1, 1]} : vector<16x32xf32> to vector<16x8xf32>
      %221 = vector.extract_strided_slice %218 {offsets = [0, 16], sizes = [16, 8], strides = [1, 1]} : vector<16x32xf32> to vector<16x8xf32>
      %222 = vector.extract_strided_slice %218 {offsets = [0, 24], sizes = [16, 8], strides = [1, 1]} : vector<16x32xf32> to vector<16x8xf32>
      %223 = vector.shape_cast %219 : vector<16x8xf32> to vector<1x16x8xf32>
      %224 = vector.shape_cast %220 : vector<16x8xf32> to vector<1x16x8xf32>
      %225 = vector.shape_cast %221 : vector<16x8xf32> to vector<1x16x8xf32>
      %226 = vector.shape_cast %222 : vector<16x8xf32> to vector<1x16x8xf32>
      %227 = tpu.concatenate %223, %224, %225, %226 in 0 : vector<1x16x8xf32>, vector<1x16x8xf32>, vector<1x16x8xf32>, vector<1x16x8xf32> -> vector<4x16x8xf32>
      %228 = arith.truncf %227 : vector<4x16x8xf32> to vector<4x16x8xbf16>
      %c0_91 = arith.constant 0 : index
      %c0_92 = arith.constant 0 : index
      %c0_93 = arith.constant 0 : index
      %229 = vector.load %arg24[%c0_91, %c0_92, %c0_93] : memref<4x16x8xbf16, #tpu.memory_space<vmem>>, vector<4x16x8xbf16>
      tpu.vector_store %arg24[%c0_91, %c0_92, %c0_93], %228 {strides = array<i32>} : memref<4x16x8xbf16, #tpu.memory_space<vmem>>, vector<4x16x8xbf16>,
      %230 = vector.extract_strided_slice %217 {offsets = [0, 32], sizes = [16, 32], strides = [1, 1]} : vector<16x64xf32> to vector<16x32xf32>
      %231 = vector.extract_strided_slice %230 {offsets = [0, 0], sizes = [16, 8], strides = [1, 1]} : vector<16x32xf32> to vector<16x8xf32>
      %232 = vector.extract_strided_slice %230 {offsets = [0, 8], sizes = [16, 8], strides = [1, 1]} : vector<16x32xf32> to vector<16x8xf32>
      %233 = vector.extract_strided_slice %230 {offsets = [0, 16], sizes = [16, 8], strides = [1, 1]} : vector<16x32xf32> to vector<16x8xf32>
      %234 = vector.extract_strided_slice %230 {offsets = [0, 24], sizes = [16, 8], strides = [1, 1]} : vector<16x32xf32> to vector<16x8xf32>
      %235 = vector.shape_cast %231 : vector<16x8xf32> to vector<1x16x8xf32>
      %236 = vector.shape_cast %232 : vector<16x8xf32> to vector<1x16x8xf32>
      %237 = vector.shape_cast %233 : vector<16x8xf32> to vector<1x16x8xf32>
      %238 = vector.shape_cast %234 : vector<16x8xf32> to vector<1x16x8xf32>
      %239 = tpu.concatenate %235, %236, %237, %238 in 0 : vector<1x16x8xf32>, vector<1x16x8xf32>, vector<1x16x8xf32>, vector<1x16x8xf32> -> vector<4x16x8xf32>
      %240 = arith.truncf %239 : vector<4x16x8xf32> to vector<4x16x8xbf16>
      %c0_94 = arith.constant 0 : index
      %c0_95 = arith.constant 0 : index
      %c0_96 = arith.constant 0 : index
      %241 = vector.load %arg25[%c0_94, %c0_95, %c0_96] : memref<4x16x8xbf16, #tpu.memory_space<vmem>>, vector<4x16x8xbf16>
      tpu.vector_store %arg25[%c0_94, %c0_95, %c0_96], %240 {strides = array<i32>} : memref<4x16x8xbf16, #tpu.memory_space<vmem>>, vector<4x16x8xbf16>,
      %c0_97 = arith.constant 0 : index
      %c0_98 = arith.constant 0 : index
      %c0_99 = arith.constant 0 : index
      %242 = vector.load %arg4[%c0_97, %c0_98, %c0_99] : memref<1x8x32xf32, #tpu.memory_space<vmem>>, vector<1x8x32xf32>
      %243 = vector.shape_cast %242 : vector<1x8x32xf32> to vector<8x32xf32>
      %244 = arith.truncf %243 : vector<8x32xf32> to vector<8x32xbf16>
      %c0_100 = arith.constant 0 : index
      %c0_101 = arith.constant 0 : index
      %245 = vector.load %arg14[%c0_100, %c0_101] : memref<32x64xbf16, #tpu.memory_space<vmem>>, vector<32x64xbf16>
      %cst_102 = arith.constant dense<0.000000e+00> : vector<8x64xf32>
      %246 = tpu.matmul %244, %245, %cst_102 {dimension_numbers = #tpu.dot_dimension_numbers<[1], [0], [0], [1], [0, 0, 1, 1], [], []>} : vector<8x32xbf16>, vector<32x64xbf16>, vector<8x64xf32> -> vector<8x64xf32>
      %c0_103 = arith.constant 0 : index
      %c0_104 = arith.constant 0 : index
      %247 = vector.load %arg17[%c0_103, %c0_104] : memref<1x64xf32, #tpu.memory_space<vmem>>, vector<1x64xf32>
      %248 = vector.broadcast %247 : vector<1x64xf32> to vector<8x64xf32>
      %249 = arith.addf %246, %248 : vector<8x64xf32>
      %250 = vector.extract_strided_slice %249 {offsets = [0, 0], sizes = [8, 32], strides = [1, 1]} : vector<8x64xf32> to vector<8x32xf32>
      %251 = vector.extract_strided_slice %250 {offsets = [0, 0], sizes = [8, 8], strides = [1, 1]} : vector<8x32xf32> to vector<8x8xf32>
      %252 = vector.extract_strided_slice %250 {offsets = [0, 8], sizes = [8, 8], strides = [1, 1]} : vector<8x32xf32> to vector<8x8xf32>
      %253 = vector.extract_strided_slice %250 {offsets = [0, 16], sizes = [8, 8], strides = [1, 1]} : vector<8x32xf32> to vector<8x8xf32>
      %254 = vector.extract_strided_slice %250 {offsets = [0, 24], sizes = [8, 8], strides = [1, 1]} : vector<8x32xf32> to vector<8x8xf32>
      %255 = vector.shape_cast %251 : vector<8x8xf32> to vector<1x8x8xf32>
      %256 = vector.shape_cast %252 : vector<8x8xf32> to vector<1x8x8xf32>
      %257 = vector.shape_cast %253 : vector<8x8xf32> to vector<1x8x8xf32>
      %258 = vector.shape_cast %254 : vector<8x8xf32> to vector<1x8x8xf32>
      %259 = tpu.concatenate %255, %256, %257, %258 in 0 : vector<1x8x8xf32>, vector<1x8x8xf32>, vector<1x8x8xf32>, vector<1x8x8xf32> -> vector<4x8x8xf32>
      %260 = arith.truncf %259 : vector<4x8x8xf32> to vector<4x8x8xbf16>
      %c0_105 = arith.constant 0 : index
      %c0_106 = arith.constant 0 : index
      %c0_107 = arith.constant 0 : index
      %261 = vector.load %arg26[%c0_105, %c0_106, %c0_107] : memref<4x8x8xbf16, #tpu.memory_space<vmem>>, vector<4x8x8xbf16>
      tpu.vector_store %arg26[%c0_105, %c0_106, %c0_107], %260 {strides = array<i32>} : memref<4x8x8xbf16, #tpu.memory_space<vmem>>, vector<4x8x8xbf16>,
      %262 = vector.extract_strided_slice %249 {offsets = [0, 32], sizes = [8, 32], strides = [1, 1]} : vector<8x64xf32> to vector<8x32xf32>
      %263 = vector.extract_strided_slice %262 {offsets = [0, 0], sizes = [8, 8], strides = [1, 1]} : vector<8x32xf32> to vector<8x8xf32>
      %264 = vector.extract_strided_slice %262 {offsets = [0, 8], sizes = [8, 8], strides = [1, 1]} : vector<8x32xf32> to vector<8x8xf32>
      %265 = vector.extract_strided_slice %262 {offsets = [0, 16], sizes = [8, 8], strides = [1, 1]} : vector<8x32xf32> to vector<8x8xf32>
      %266 = vector.extract_strided_slice %262 {offsets = [0, 24], sizes = [8, 8], strides = [1, 1]} : vector<8x32xf32> to vector<8x8xf32>
      %267 = vector.shape_cast %263 : vector<8x8xf32> to vector<1x8x8xf32>
      %268 = vector.shape_cast %264 : vector<8x8xf32> to vector<1x8x8xf32>
      %269 = vector.shape_cast %265 : vector<8x8xf32> to vector<1x8x8xf32>
      %270 = vector.shape_cast %266 : vector<8x8xf32> to vector<1x8x8xf32>
      %271 = tpu.concatenate %267, %268, %269, %270 in 0 : vector<1x8x8xf32>, vector<1x8x8xf32>, vector<1x8x8xf32>, vector<1x8x8xf32> -> vector<4x8x8xf32>
      %272 = arith.truncf %271 : vector<4x8x8xf32> to vector<4x8x8xbf16>
      %c0_108 = arith.constant 0 : index
      %c0_109 = arith.constant 0 : index
      %c0_110 = arith.constant 0 : index
      %273 = vector.load %arg27[%c0_108, %c0_109, %c0_110] : memref<4x8x8xbf16, #tpu.memory_space<vmem>>, vector<4x8x8xbf16>
      tpu.vector_store %arg27[%c0_108, %c0_109, %c0_110], %272 {strides = array<i32>} : memref<4x8x8xbf16, #tpu.memory_space<vmem>>, vector<4x8x8xbf16>,
    } else {
    }
    %c0_6 = arith.constant 0 : index
    %c0_7 = arith.constant 0 : index
    %c0_8 = arith.constant 0 : index
    %17 = vector.load %arg2[%c0_6, %c0_7, %c0_8] : memref<1x8x32xf32, #tpu.memory_space<vmem>>, vector<1x8x32xf32>
    %18 = vector.shape_cast %17 : vector<1x8x32xf32> to vector<8x32xf32>
    %cst_9 = arith.constant dense<0.000000e+00> : vector<8xf32>
    %19 = vector.multi_reduction <add>, %18, %cst_9 [1] : vector<8x32xf32> to vector<8xf32>
    %20 = vector.shape_cast %19 : vector<8xf32> to vector<8x1xf32>
    %cst_10 = arith.constant 3.200000e+01 : f32
    %21 = vector.broadcast %cst_10 : f32 to vector<8x1xf32>
    %22 = arith.divf %20, %21 : vector<8x1xf32>
    %23 = vector.broadcast %22 : vector<8x1xf32> to vector<8x32xf32>
    %24 = arith.subf %18, %23 : vector<8x32xf32>
    %25 = arith.mulf %24, %24 : vector<8x32xf32>
    %cst_11 = arith.constant dense<0.000000e+00> : vector<8xf32>
    %26 = vector.multi_reduction <add>, %25, %cst_11 [1] : vector<8x32xf32> to vector<8xf32>
    %27 = vector.shape_cast %26 : vector<8xf32> to vector<8x1xf32>
    %cst_12 = arith.constant 3.200000e+01 : f32
    %28 = vector.broadcast %cst_12 : f32 to vector<8x1xf32>
    %29 = arith.divf %27, %28 : vector<8x1xf32>
    %cst_13 = arith.constant 9.99999997E-7 : f32
    %30 = vector.broadcast %cst_13 : f32 to vector<8x1xf32>
    %31 = arith.addf %29, %30 : vector<8x1xf32>
    %32 = math.rsqrt %31 : vector<8x1xf32>
    %33 = vector.broadcast %32 : vector<8x1xf32> to vector<8x32xf32>
    %34 = arith.mulf %24, %33 : vector<8x32xf32>
    %35 = vector.broadcast %7 : vector<1x32xf32> to vector<8x32xf32>
    %36 = arith.mulf %34, %35 : vector<8x32xf32>
    %37 = vector.broadcast %4 : vector<1x32xf32> to vector<8x32xf32>
    %38 = arith.addf %36, %37 : vector<8x32xf32>
    %39 = arith.truncf %38 : vector<8x32xf32> to vector<8x32xbf16>
    %c0_14 = arith.constant 0 : index
    %c0_15 = arith.constant 0 : index
    %40 = vector.load %arg7[%c0_14, %c0_15] : memref<32x32xbf16, #tpu.memory_space<vmem>>, vector<32x32xbf16>
    %cst_16 = arith.constant dense<0.000000e+00> : vector<8x32xf32>
    %41 = tpu.matmul %39, %40, %cst_16 {dimension_numbers = #tpu.dot_dimension_numbers<[1], [0], [0], [1], [0, 0, 1, 1], [], []>} : vector<8x32xbf16>, vector<32x32xbf16>, vector<8x32xf32> -> vector<8x32xf32>
    %c0_17 = arith.constant 0 : index
    %c0_18 = arith.constant 0 : index
    %42 = vector.load %arg10[%c0_17, %c0_18] : memref<1x32xf32, #tpu.memory_space<vmem>>, vector<1x32xf32>
    %43 = vector.broadcast %42 : vector<1x32xf32> to vector<8x32xf32>
    %44 = arith.addf %41, %43 : vector<8x32xf32>
    %45 = vector.extract_strided_slice %44 {offsets = [0, 0], sizes = [8, 8], strides = [1, 1]} : vector<8x32xf32> to vector<8x8xf32>
    %46 = vector.extract_strided_slice %44 {offsets = [0, 8], sizes = [8, 8], strides = [1, 1]} : vector<8x32xf32> to vector<8x8xf32>
    %47 = vector.extract_strided_slice %44 {offsets = [0, 16], sizes = [8, 8], strides = [1, 1]} : vector<8x32xf32> to vector<8x8xf32>
    %48 = vector.extract_strided_slice %44 {offsets = [0, 24], sizes = [8, 8], strides = [1, 1]} : vector<8x32xf32> to vector<8x8xf32>
    %49 = vector.shape_cast %45 : vector<8x8xf32> to vector<1x8x8xf32>
    %50 = vector.shape_cast %46 : vector<8x8xf32> to vector<1x8x8xf32>
    %51 = vector.shape_cast %47 : vector<8x8xf32> to vector<1x8x8xf32>
    %52 = vector.shape_cast %48 : vector<8x8xf32> to vector<1x8x8xf32>
    %53 = tpu.concatenate %49, %50, %51, %52 in 0 : vector<1x8x8xf32>, vector<1x8x8xf32>, vector<1x8x8xf32>, vector<1x8x8xf32> -> vector<4x8x8xf32>
    %54 = arith.truncf %53 : vector<4x8x8xf32> to vector<4x8x8xbf16>
    %c0_19 = arith.constant 0 : index
    %c0_20 = arith.constant 0 : index
    %c0_21 = arith.constant 0 : index
    %55 = vector.load %arg24[%c0_19, %c0_20, %c0_21] : memref<4x16x8xbf16, #tpu.memory_space<vmem>>, vector<4x16x8xbf16>
    %c0_22 = arith.constant 0 : index
    %c0_23 = arith.constant 0 : index
    %c0_24 = arith.constant 0 : index
    %56 = vector.load %arg25[%c0_22, %c0_23, %c0_24] : memref<4x16x8xbf16, #tpu.memory_space<vmem>>, vector<4x16x8xbf16>
    "tpu.trace_start"() <{level = 10 : i32, message = "hqd,hkd->hqk"}> : () -> ()
    %cst_25 = arith.constant dense<0.000000e+00> : vector<4x8x16xf32>
    %57 = tpu.matmul %54, %55, %cst_25 {dimension_numbers = #tpu.dot_dimension_numbers<[2], [2], [1], [1], [0, 0, 0, 1, 1, 1], [0], [0]>} : vector<4x8x8xbf16>, vector<4x16x8xbf16>, vector<4x8x16xf32> -> vector<4x8x16xf32>
    "tpu.trace_stop"() : () -> ()
    %cst_26 = arith.constant 0.353553385 : f32
    %58 = vector.broadcast %cst_26 : f32 to vector<4x8x16xf32>
    %59 = arith.mulf %57, %58 : vector<4x8x16xf32>
    %cst_27 = arith.constant dense<0xFF800000> : vector<4x8xf32>
    %60 = vector.multi_reduction <maximumf>, %59, %cst_27 [2] : vector<4x8x16xf32> to vector<4x8xf32>
    %61 = vector.shape_cast %60 : vector<4x8xf32> to vector<4x8x1xf32>
    %62 = vector.broadcast %61 : vector<4x8x1xf32> to vector<4x8x16xf32>
    %63 = arith.subf %59, %62 : vector<4x8x16xf32>
    %64 = math.exp %63 : vector<4x8x16xf32>
    %cst_28 = arith.constant dense<0.000000e+00> : vector<4x8xf32>
    %65 = vector.multi_reduction <add>, %64, %cst_28 [2] : vector<4x8x16xf32> to vector<4x8xf32>
    %66 = vector.shape_cast %65 : vector<4x8xf32> to vector<4x8x1xf32>
    %67 = tpu.reciprocal %66 {approx = true} : vector<4x8x1xf32> -> vector<4x8x1xf32>
    %68 = vector.broadcast %67 : vector<4x8x1xf32> to vector<4x8x16xf32>
    %69 = arith.mulf %64, %68 : vector<4x8x16xf32>
    %70 = arith.truncf %69 : vector<4x8x16xf32> to vector<4x8x16xbf16>
    "tpu.trace_start"() <{level = 10 : i32, message = "hqk,hkd->hqd"}> : () -> ()
    %cst_29 = arith.constant dense<0.000000e+00> : vector<4x8x8xf32>
    %71 = tpu.matmul %70, %56, %cst_29 {dimension_numbers = #tpu.dot_dimension_numbers<[2], [1], [1], [2], [0, 0, 0, 1, 1, 2], [0], [0]>} : vector<4x8x16xbf16>, vector<4x16x8xbf16>, vector<4x8x8xf32> -> vector<4x8x8xf32>
    "tpu.trace_stop"() : () -> ()
    %72 = vector.extract_strided_slice %71 {offsets = [0, 0, 0], sizes = [1, 8, 8], strides = [1, 1, 1]} : vector<4x8x8xf32> to vector<1x8x8xf32>
    %73 = vector.shape_cast %72 : vector<1x8x8xf32> to vector<8x8xf32>
    %74 = vector.extract_strided_slice %71 {offsets = [1, 0, 0], sizes = [1, 8, 8], strides = [1, 1, 1]} : vector<4x8x8xf32> to vector<1x8x8xf32>
    %75 = vector.shape_cast %74 : vector<1x8x8xf32> to vector<8x8xf32>
    %76 = vector.extract_strided_slice %71 {offsets = [2, 0, 0], sizes = [1, 8, 8], strides = [1, 1, 1]} : vector<4x8x8xf32> to vector<1x8x8xf32>
    %77 = vector.shape_cast %76 : vector<1x8x8xf32> to vector<8x8xf32>
    %78 = vector.extract_strided_slice %71 {offsets = [3, 0, 0], sizes = [1, 8, 8], strides = [1, 1, 1]} : vector<4x8x8xf32> to vector<1x8x8xf32>
    %79 = vector.shape_cast %78 : vector<1x8x8xf32> to vector<8x8xf32>
    %80 = tpu.concatenate %73, %75, %77, %79 in 1 : vector<8x8xf32>, vector<8x8xf32>, vector<8x8xf32>, vector<8x8xf32> -> vector<8x32xf32>
    %81 = arith.truncf %80 : vector<8x32xf32> to vector<8x32xbf16>
    %c0_30 = arith.constant 0 : index
    %c0_31 = arith.constant 0 : index
    %82 = vector.load %arg9[%c0_30, %c0_31] : memref<32x32xbf16, #tpu.memory_space<vmem>>, vector<32x32xbf16>
    %cst_32 = arith.constant dense<0.000000e+00> : vector<8x32xf32>
    %83 = tpu.matmul %81, %82, %cst_32 {dimension_numbers = #tpu.dot_dimension_numbers<[1], [0], [0], [1], [0, 0, 1, 1], [], []>} : vector<8x32xbf16>, vector<32x32xbf16>, vector<8x32xf32> -> vector<8x32xf32>
    %c0_33 = arith.constant 0 : index
    %c0_34 = arith.constant 0 : index
    %84 = vector.load %arg12[%c0_33, %c0_34] : memref<1x32xf32, #tpu.memory_space<vmem>>, vector<1x32xf32>
    %85 = vector.broadcast %84 : vector<1x32xf32> to vector<8x32xf32>
    %86 = arith.addf %83, %85 : vector<8x32xf32>
    %87 = vector.broadcast %8 : vector<1x32xf32> to vector<8x32xf32>
    %88 = arith.mulf %87, %86 : vector<8x32xf32>
    %89 = arith.addf %18, %88 : vector<8x32xf32>
    %90 = arith.truncf %89 : vector<8x32xf32> to vector<8x32xbf16>
    %c0_35 = arith.constant 0 : index
    %c0_36 = arith.constant 0 : index
    %91 = vector.load %arg13[%c0_35, %c0_36] : memref<32x32xbf16, #tpu.memory_space<vmem>>, vector<32x32xbf16>
    %cst_37 = arith.constant dense<0.000000e+00> : vector<8x32xf32>
    %92 = tpu.matmul %90, %91, %cst_37 {dimension_numbers = #tpu.dot_dimension_numbers<[1], [0], [0], [1], [0, 0, 1, 1], [], []>} : vector<8x32xbf16>, vector<32x32xbf16>, vector<8x32xf32> -> vector<8x32xf32>
    %c0_38 = arith.constant 0 : index
    %c0_39 = arith.constant 0 : index
    %93 = vector.load %arg16[%c0_38, %c0_39] : memref<1x32xf32, #tpu.memory_space<vmem>>, vector<1x32xf32>
    %94 = vector.broadcast %93 : vector<1x32xf32> to vector<8x32xf32>
    %95 = arith.addf %92, %94 : vector<8x32xf32>
    %96 = vector.extract_strided_slice %95 {offsets = [0, 0], sizes = [8, 8], strides = [1, 1]} : vector<8x32xf32> to vector<8x8xf32>
    %97 = vector.extract_strided_slice %95 {offsets = [0, 8], sizes = [8, 8], strides = [1, 1]} : vector<8x32xf32> to vector<8x8xf32>
    %98 = vector.extract_strided_slice %95 {offsets = [0, 16], sizes = [8, 8], strides = [1, 1]} : vector<8x32xf32> to vector<8x8xf32>
    %99 = vector.extract_strided_slice %95 {offsets = [0, 24], sizes = [8, 8], strides = [1, 1]} : vector<8x32xf32> to vector<8x8xf32>
    %100 = vector.shape_cast %96 : vector<8x8xf32> to vector<1x8x8xf32>
    %101 = vector.shape_cast %97 : vector<8x8xf32> to vector<1x8x8xf32>
    %102 = vector.shape_cast %98 : vector<8x8xf32> to vector<1x8x8xf32>
    %103 = vector.shape_cast %99 : vector<8x8xf32> to vector<1x8x8xf32>
    %104 = tpu.concatenate %100, %101, %102, %103 in 0 : vector<1x8x8xf32>, vector<1x8x8xf32>, vector<1x8x8xf32>, vector<1x8x8xf32> -> vector<4x8x8xf32>
    %105 = arith.truncf %104 : vector<4x8x8xf32> to vector<4x8x8xbf16>
    %c0_40 = arith.constant 0 : index
    %c0_41 = arith.constant 0 : index
    %c0_42 = arith.constant 0 : index
    %106 = vector.load %arg26[%c0_40, %c0_41, %c0_42] : memref<4x8x8xbf16, #tpu.memory_space<vmem>>, vector<4x8x8xbf16>
    %c0_43 = arith.constant 0 : index
    %c0_44 = arith.constant 0 : index
    %c0_45 = arith.constant 0 : index
    %107 = vector.load %arg27[%c0_43, %c0_44, %c0_45] : memref<4x8x8xbf16, #tpu.memory_space<vmem>>, vector<4x8x8xbf16>
    "tpu.trace_start"() <{level = 10 : i32, message = "hqd,hkd->hqk"}> : () -> ()
    %cst_46 = arith.constant dense<0.000000e+00> : vector<4x8x8xf32>
    %108 = tpu.matmul %105, %106, %cst_46 {dimension_numbers = #tpu.dot_dimension_numbers<[2], [2], [1], [1], [0, 0, 0, 1, 1, 1], [0], [0]>} : vector<4x8x8xbf16>, vector<4x8x8xbf16>, vector<4x8x8xf32> -> vector<4x8x8xf32>
    "tpu.trace_stop"() : () -> ()
    %cst_47 = arith.constant 0.353553385 : f32
    %109 = vector.broadcast %cst_47 : f32 to vector<4x8x8xf32>
    %110 = arith.mulf %108, %109 : vector<4x8x8xf32>
    %cst_48 = arith.constant dense<0xFF800000> : vector<4x8xf32>
    %111 = vector.multi_reduction <maximumf>, %110, %cst_48 [2] : vector<4x8x8xf32> to vector<4x8xf32>
    %112 = vector.shape_cast %111 : vector<4x8xf32> to vector<4x8x1xf32>
    %113 = vector.broadcast %112 : vector<4x8x1xf32> to vector<4x8x8xf32>
    %114 = arith.subf %110, %113 : vector<4x8x8xf32>
    %115 = math.exp %114 : vector<4x8x8xf32>
    %cst_49 = arith.constant dense<0.000000e+00> : vector<4x8xf32>
    %116 = vector.multi_reduction <add>, %115, %cst_49 [2] : vector<4x8x8xf32> to vector<4x8xf32>
    %117 = vector.shape_cast %116 : vector<4x8xf32> to vector<4x8x1xf32>
    %118 = tpu.reciprocal %117 {approx = true} : vector<4x8x1xf32> -> vector<4x8x1xf32>
    %119 = vector.broadcast %118 : vector<4x8x1xf32> to vector<4x8x8xf32>
    %120 = arith.mulf %115, %119 : vector<4x8x8xf32>
    %121 = arith.truncf %120 : vector<4x8x8xf32> to vector<4x8x8xbf16>
    "tpu.trace_start"() <{level = 10 : i32, message = "hqk,hkd->hqd"}> : () -> ()
    %cst_50 = arith.constant dense<0.000000e+00> : vector<4x8x8xf32>
    %122 = tpu.matmul %121, %107, %cst_50 {dimension_numbers = #tpu.dot_dimension_numbers<[2], [1], [1], [2], [0, 0, 0, 1, 1, 2], [0], [0]>} : vector<4x8x8xbf16>, vector<4x8x8xbf16>, vector<4x8x8xf32> -> vector<4x8x8xf32>
    "tpu.trace_stop"() : () -> ()
    %123 = vector.extract_strided_slice %122 {offsets = [0, 0, 0], sizes = [1, 8, 8], strides = [1, 1, 1]} : vector<4x8x8xf32> to vector<1x8x8xf32>
    %124 = vector.shape_cast %123 : vector<1x8x8xf32> to vector<8x8xf32>
    %125 = vector.extract_strided_slice %122 {offsets = [1, 0, 0], sizes = [1, 8, 8], strides = [1, 1, 1]} : vector<4x8x8xf32> to vector<1x8x8xf32>
    %126 = vector.shape_cast %125 : vector<1x8x8xf32> to vector<8x8xf32>
    %127 = vector.extract_strided_slice %122 {offsets = [2, 0, 0], sizes = [1, 8, 8], strides = [1, 1, 1]} : vector<4x8x8xf32> to vector<1x8x8xf32>
    %128 = vector.shape_cast %127 : vector<1x8x8xf32> to vector<8x8xf32>
    %129 = vector.extract_strided_slice %122 {offsets = [3, 0, 0], sizes = [1, 8, 8], strides = [1, 1, 1]} : vector<4x8x8xf32> to vector<1x8x8xf32>
    %130 = vector.shape_cast %129 : vector<1x8x8xf32> to vector<8x8xf32>
    %131 = tpu.concatenate %124, %126, %128, %130 in 1 : vector<8x8xf32>, vector<8x8xf32>, vector<8x8xf32>, vector<8x8xf32> -> vector<8x32xf32>
    %132 = arith.truncf %131 : vector<8x32xf32> to vector<8x32xbf16>
    %c0_51 = arith.constant 0 : index
    %c0_52 = arith.constant 0 : index
    %133 = vector.load %arg15[%c0_51, %c0_52] : memref<32x32xbf16, #tpu.memory_space<vmem>>, vector<32x32xbf16>
    %cst_53 = arith.constant dense<0.000000e+00> : vector<8x32xf32>
    %134 = tpu.matmul %132, %133, %cst_53 {dimension_numbers = #tpu.dot_dimension_numbers<[1], [0], [0], [1], [0, 0, 1, 1], [], []>} : vector<8x32xbf16>, vector<32x32xbf16>, vector<8x32xf32> -> vector<8x32xf32>
    %c0_54 = arith.constant 0 : index
    %c0_55 = arith.constant 0 : index
    %135 = vector.load %arg18[%c0_54, %c0_55] : memref<1x32xf32, #tpu.memory_space<vmem>>, vector<1x32xf32>
    %136 = vector.broadcast %135 : vector<1x32xf32> to vector<8x32xf32>
    %137 = arith.addf %134, %136 : vector<8x32xf32>
    %138 = arith.addf %89, %137 : vector<8x32xf32>
    %cst_56 = arith.constant dense<0.000000e+00> : vector<8xf32>
    %139 = vector.multi_reduction <add>, %138, %cst_56 [1] : vector<8x32xf32> to vector<8xf32>
    %140 = vector.shape_cast %139 : vector<8xf32> to vector<8x1xf32>
    %cst_57 = arith.constant 3.200000e+01 : f32
    %141 = vector.broadcast %cst_57 : f32 to vector<8x1xf32>
    %142 = arith.divf %140, %141 : vector<8x1xf32>
    %143 = vector.broadcast %142 : vector<8x1xf32> to vector<8x32xf32>
    %144 = arith.subf %138, %143 : vector<8x32xf32>
    %145 = arith.mulf %144, %144 : vector<8x32xf32>
    %cst_58 = arith.constant dense<0.000000e+00> : vector<8xf32>
    %146 = vector.multi_reduction <add>, %145, %cst_58 [1] : vector<8x32xf32> to vector<8xf32>
    %147 = vector.shape_cast %146 : vector<8xf32> to vector<8x1xf32>
    %cst_59 = arith.constant 3.200000e+01 : f32
    %148 = vector.broadcast %cst_59 : f32 to vector<8x1xf32>
    %149 = arith.divf %147, %148 : vector<8x1xf32>
    %cst_60 = arith.constant 9.99999997E-7 : f32
    %150 = vector.broadcast %cst_60 : f32 to vector<8x1xf32>
    %151 = arith.addf %149, %150 : vector<8x1xf32>
    %152 = math.rsqrt %151 : vector<8x1xf32>
    %153 = vector.broadcast %152 : vector<8x1xf32> to vector<8x32xf32>
    %154 = arith.mulf %144, %153 : vector<8x32xf32>
    %155 = vector.broadcast %12 : vector<1x32xf32> to vector<8x32xf32>
    %156 = arith.mulf %154, %155 : vector<8x32xf32>
    %157 = vector.broadcast %9 : vector<1x32xf32> to vector<8x32xf32>
    %158 = arith.addf %156, %157 : vector<8x32xf32>
    %159 = arith.truncf %158 : vector<8x32xf32> to vector<8x32xbf16>
    %c0_61 = arith.constant 0 : index
    %c0_62 = arith.constant 0 : index
    %160 = vector.load %arg19[%c0_61, %c0_62] : memref<32x128xbf16, #tpu.memory_space<vmem>>, vector<32x128xbf16>
    %cst_63 = arith.constant dense<0.000000e+00> : vector<8x128xf32>
    %161 = tpu.matmul %159, %160, %cst_63 {dimension_numbers = #tpu.dot_dimension_numbers<[1], [0], [0], [1], [0, 0, 1, 1], [], []>} : vector<8x32xbf16>, vector<32x128xbf16>, vector<8x128xf32> -> vector<8x128xf32>
    %c0_64 = arith.constant 0 : index
    %c0_65 = arith.constant 0 : index
    %162 = vector.load %arg20[%c0_64, %c0_65] : memref<1x128xf32, #tpu.memory_space<vmem>>, vector<1x128xf32>
    %163 = vector.broadcast %162 : vector<1x128xf32> to vector<8x128xf32>
    %164 = arith.addf %161, %163 : vector<8x128xf32>
    %cst_66 = arith.constant 5.000000e-01 : f32
    %165 = vector.broadcast %cst_66 : f32 to vector<8x128xf32>
    %166 = arith.mulf %165, %164 : vector<8x128xf32>
    %cst_67 = arith.constant 4.471500e-02 : f32
    %167 = vector.broadcast %cst_67 : f32 to vector<8x128xf32>
    %168 = arith.mulf %167, %164 : vector<8x128xf32>
    %169 = arith.mulf %168, %164 : vector<8x128xf32>
    %170 = arith.mulf %169, %164 : vector<8x128xf32>
    %171 = arith.addf %164, %170 : vector<8x128xf32>
    %cst_68 = arith.constant 0.797884583 : f32
    %172 = vector.broadcast %cst_68 : f32 to vector<8x128xf32>
    %173 = arith.mulf %172, %171 : vector<8x128xf32>
    %174 = math.tanh %173 : vector<8x128xf32>
    %cst_69 = arith.constant 1.000000e+00 : f32
    %175 = vector.broadcast %cst_69 : f32 to vector<8x128xf32>
    %176 = arith.addf %175, %174 : vector<8x128xf32>
    %177 = arith.mulf %166, %176 : vector<8x128xf32>
    %178 = arith.truncf %177 : vector<8x128xf32> to vector<8x128xbf16>
    %c0_70 = arith.constant 0 : index
    %c0_71 = arith.constant 0 : index
    %179 = vector.load %arg21[%c0_70, %c0_71] : memref<128x32xbf16, #tpu.memory_space<vmem>>, vector<128x32xbf16>
    %cst_72 = arith.constant dense<0.000000e+00> : vector<8x32xf32>
    %180 = tpu.matmul %178, %179, %cst_72 {dimension_numbers = #tpu.dot_dimension_numbers<[1], [0], [0], [1], [0, 0, 1, 1], [], []>} : vector<8x128xbf16>, vector<128x32xbf16>, vector<8x32xf32> -> vector<8x32xf32>
    %c0_73 = arith.constant 0 : index
    %c0_74 = arith.constant 0 : index
    %181 = vector.load %arg22[%c0_73, %c0_74] : memref<1x32xf32, #tpu.memory_space<vmem>>, vector<1x32xf32>
    %182 = vector.broadcast %181 : vector<1x32xf32> to vector<8x32xf32>
    %183 = arith.addf %180, %182 : vector<8x32xf32>
    %184 = vector.broadcast %13 : vector<1x32xf32> to vector<8x32xf32>
    %185 = arith.mulf %184, %183 : vector<8x32xf32>
    %186 = arith.addf %138, %185 : vector<8x32xf32>
    %c0_75 = arith.constant 0 : index
    %c0_76 = arith.constant 0 : index
    %c0_77 = arith.constant 0 : index
    %187 = vector.load %arg23[%c0_75, %c0_76, %c0_77] : memref<1x8x32xf32, #tpu.memory_space<vmem>>, vector<1x8x32xf32>
    %188 = vector.shape_cast %187 : vector<1x8x32xf32> to vector<8x32xf32>
    %189 = vector.shape_cast %186 : vector<8x32xf32> to vector<1x8x32xf32>
    tpu.vector_store %arg23[%c0_75, %c0_76, %c0_77], %189 {strides = array<i32>} : memref<1x8x32xf32, #tpu.memory_space<vmem>>, vector<1x8x32xf32>,
    return
  }
  func.func @transform_0(%arg0: i32, %arg1: i32) -> (i32, i32, i32) {
    %c0_i32 = arith.constant 0 : i32
    %c0_i32_0 = arith.constant 0 : i32
    return %arg0, %arg1, %c0_i32 : i32, i32, i32
  }
  func.func @transform_1(%arg0: i32, %arg1: i32) -> (i32, i32, i32) {
    %c0_i32 = arith.constant 0 : i32
    %c0_i32_0 = arith.constant 0 : i32
    %c0_i32_1 = arith.constant 0 : i32
    return %arg0, %c0_i32, %c0_i32_0 : i32, i32, i32
  }
  func.func @transform_2(%arg0: i32, %arg1: i32) -> (i32, i32, i32) {
    %c0_i32 = arith.constant 0 : i32
    %c0_i32_0 = arith.constant 0 : i32
    %c0_i32_1 = arith.constant 0 : i32
    return %arg0, %c0_i32, %c0_i32_0 : i32, i32, i32
  }
  func.func @transform_3(%arg0: i32, %arg1: i32) -> (i32, i32, i32) {
    %c0_i32 = arith.constant 0 : i32
    %c0_i32_0 = arith.constant 0 : i32
    %c0_i32_1 = arith.constant 0 : i32
    return %arg0, %c0_i32, %c0_i32_0 : i32, i32, i32
  }
  func.func @transform_4(%arg0: i32, %arg1: i32) -> (i32, i32) {
    %c0_i32 = arith.constant 0 : i32
    %c0_i32_0 = arith.constant 0 : i32
    %c0_i32_1 = arith.constant 0 : i32
    return %c0_i32, %c0_i32_0 : i32, i32
  }
  func.func @transform_5(%arg0: i32, %arg1: i32) -> (i32, i32) {
    %c0_i32 = arith.constant 0 : i32
    %c0_i32_0 = arith.constant 0 : i32
    %c0_i32_1 = arith.constant 0 : i32
    return %c0_i32, %c0_i32_0 : i32, i32
  }
  func.func @transform_6(%arg0: i32, %arg1: i32) -> (i32, i32) {
    %c0_i32 = arith.constant 0 : i32
    %c0_i32_0 = arith.constant 0 : i32
    %c0_i32_1 = arith.constant 0 : i32
    return %c0_i32, %c0_i32_0 : i32, i32
  }
  func.func @transform_7(%arg0: i32, %arg1: i32) -> (i32, i32) {
    %c0_i32 = arith.constant 0 : i32
    %c0_i32_0 = arith.constant 0 : i32
    %c0_i32_1 = arith.constant 0 : i32
    return %c0_i32, %c0_i32_0 : i32, i32
  }
  func.func @transform_8(%arg0: i32, %arg1: i32) -> (i32, i32) {
    %c0_i32 = arith.constant 0 : i32
    %c0_i32_0 = arith.constant 0 : i32
    %c0_i32_1 = arith.constant 0 : i32
    return %c0_i32, %c0_i32_0 : i32, i32
  }
  func.func @transform_9(%arg0: i32, %arg1: i32) -> (i32, i32) {
    %c0_i32 = arith.constant 0 : i32
    %c0_i32_0 = arith.constant 0 : i32
    %c0_i32_1 = arith.constant 0 : i32
    return %c0_i32, %c0_i32_0 : i32, i32
  }
  func.func @transform_10(%arg0: i32, %arg1: i32) -> (i32, i32) {
    %c0_i32 = arith.constant 0 : i32
    %c0_i32_0 = arith.constant 0 : i32
    %c0_i32_1 = arith.constant 0 : i32
    return %c0_i32, %c0_i32_0 : i32, i32
  }
  func.func @transform_11(%arg0: i32, %arg1: i32) -> (i32, i32) {
    %c0_i32 = arith.constant 0 : i32
    %c0_i32_0 = arith.constant 0 : i32
    %c0_i32_1 = arith.constant 0 : i32
    return %c0_i32, %c0_i32_0 : i32, i32
  }
  func.func @transform_12(%arg0: i32, %arg1: i32) -> (i32, i32) {
    %c0_i32 = arith.constant 0 : i32
    %c0_i32_0 = arith.constant 0 : i32
    %c0_i32_1 = arith.constant 0 : i32
    return %c0_i32, %c0_i32_0 : i32, i32
  }
  func.func @transform_13(%arg0: i32, %arg1: i32) -> (i32, i32) {
    %c0_i32 = arith.constant 0 : i32
    %c0_i32_0 = arith.constant 0 : i32
    %c0_i32_1 = arith.constant 0 : i32
    return %c0_i32, %c0_i32_0 : i32, i32
  }
  func.func @transform_14(%arg0: i32, %arg1: i32) -> (i32, i32) {
    %c0_i32 = arith.constant 0 : i32
    %c0_i32_0 = arith.constant 0 : i32
    %c0_i32_1 = arith.constant 0 : i32
    return %c0_i32, %c0_i32_0 : i32, i32
  }
  func.func @transform_15(%arg0: i32, %arg1: i32) -> (i32, i32) {
    %c0_i32 = arith.constant 0 : i32
    %c0_i32_0 = arith.constant 0 : i32
    %c0_i32_1 = arith.constant 0 : i32
    return %c0_i32, %c0_i32_0 : i32, i32
  }
  func.func @transform_16(%arg0: i32, %arg1: i32) -> (i32, i32) {
    %c0_i32 = arith.constant 0 : i32
    %c0_i32_0 = arith.constant 0 : i32
    %c0_i32_1 = arith.constant 0 : i32
    return %c0_i32, %c0_i32_0 : i32, i32
  }
  func.func @transform_17(%arg0: i32, %arg1: i32) -> (i32, i32) {
    %c0_i32 = arith.constant 0 : i32
    %c0_i32_0 = arith.constant 0 : i32
    %c0_i32_1 = arith.constant 0 : i32
    return %c0_i32, %c0_i32_0 : i32, i32
  }
  func.func @transform_18(%arg0: i32, %arg1: i32) -> (i32, i32) {
    %c0_i32 = arith.constant 0 : i32
    %c0_i32_0 = arith.constant 0 : i32
    %c0_i32_1 = arith.constant 0 : i32
    return %c0_i32, %c0_i32_0 : i32, i32
  }
  func.func @transform_19(%arg0: i32, %arg1: i32) -> (i32, i32) {
    %c0_i32 = arith.constant 0 : i32
    %c0_i32_0 = arith.constant 0 : i32
    %c0_i32_1 = arith.constant 0 : i32
    return %c0_i32, %c0_i32_0 : i32, i32
  }
  func.func @transform_20(%arg0: i32, %arg1: i32) -> (i32, i32) {
    %c0_i32 = arith.constant 0 : i32
    %c0_i32_0 = arith.constant 0 : i32
    %c0_i32_1 = arith.constant 0 : i32
    return %c0_i32, %c0_i32_0 : i32, i32
  }
  func.func @transform_21(%arg0: i32, %arg1: i32) -> (i32, i32, i32) {
    %c0_i32 = arith.constant 0 : i32
    %c0_i32_0 = arith.constant 0 : i32
    return %arg0, %arg1, %c0_i32 : i32, i32, i32
  }
}

</mosaic_0001>

<llo_original>
// kernel: tpu_custom_call.1
$region0: #{tpu_custom_call.1}
  #allocation0 [shape = 'u32[]', space=smem, size = 0x4, offset = 0x4, fixed_abs, tag = 'smem constant byte address 0x4 - core index']
  #allocation1 [shape = 'u32[72,128]{1,0:T(1,128)}', space=vmem, size = 0x9000, scoped, tag = 'internal scratch']
  #allocation2 [shape = 'bf16[4,16,8]{2,1,0:T(8,128)(2,1)}', space=vmem, size = 0x4000, scoped, tag = 'scratch operand']
  #allocation3 [shape = 'bf16[4,16,8]{2,1,0:T(8,128)(2,1)}', space=vmem, size = 0x4000, scoped, tag = 'scratch operand']
  #allocation4 [shape = 'bf16[4,8,8]{2,1,0:T(8,128)(2,1)}', space=vmem, size = 0x2000, scoped, tag = 'scratch operand']
  #allocation5 [shape = 'bf16[4,8,8]{2,1,0:T(8,128)(2,1)}', space=vmem, size = 0x2000, scoped, tag = 'scratch operand']
  %s0 = inlined_call_operand.vmem [shape: f32[2,16,32], index: 0, kind: input, shape index: {}]
  %s1 = inlined_call_operand.vmem [shape: f32[2,16,32], index: 1, kind: input, shape index: {}]
  %s2 = inlined_call_operand.vmem [shape: f32[2,8,32], index: 2, kind: input, shape index: {}]
  %s3 = inlined_call_operand.vmem [shape: f32[2,6,32], index: 3, kind: input, shape index: {}]
  %s4 = inlined_call_operand.hbm [shape: f32[6,32], index: 4, kind: input, shape index: {}]
  %s5 = inlined_call_operand.hbm [shape: bf16[32,32], index: 5, kind: input, shape index: {}]
  %s6 = inlined_call_operand.vmem [shape: bf16[32,64], index: 6, kind: input, shape index: {}]
  %s7 = inlined_call_operand.hbm [shape: bf16[32,32], index: 7, kind: input, shape index: {}]
  %s8 = inlined_call_operand.vmem [shape: f32[1,32], index: 8, kind: input, shape index: {}]
  %s9 = inlined_call_operand.vmem [shape: f32[1,64], index: 9, kind: input, shape index: {}]
  %s10 = inlined_call_operand.vmem [shape: f32[1,32], index: 10, kind: input, shape index: {}]
  %s11 = inlined_call_operand.hbm [shape: bf16[32,32], index: 11, kind: input, shape index: {}]
  %s12 = inlined_call_operand.hbm [shape: bf16[32,64], index: 12, kind: input, shape index: {}]
  %s13 = inlined_call_operand.hbm [shape: bf16[32,32], index: 13, kind: input, shape index: {}]
  %s14 = inlined_call_operand.vmem [shape: f32[1,32], index: 14, kind: input, shape index: {}]
  %s15 = inlined_call_operand.vmem [shape: f32[1,64], index: 15, kind: input, shape index: {}]
  %s16 = inlined_call_operand.vmem [shape: f32[1,32], index: 16, kind: input, shape index: {}]
  %s17 = inlined_call_operand.hbm [shape: bf16[32,128], index: 17, kind: input, shape index: {}]
  %s18 = inlined_call_operand.vmem [shape: f32[1,128], index: 18, kind: input, shape index: {}]
  %s19 = inlined_call_operand.vmem [shape: bf16[128,32], index: 19, kind: input, shape index: {}]
  %s20 = inlined_call_operand.vmem [shape: f32[1,32], index: 20, kind: input, shape index: {}]
  %s21 = inlined_call_operand.hbm [shape: f32[2,16,32], index: 21, kind: output, shape index: {}]
  %s22 = sld [smem:[#allocation0]]
  $region149: #{tpu_custom_call.1} parent=0
    _
  %s24 = ssub.s32 1, %s22
  %s25 = scalar_select 0, %s24, %s22
  $region1: #{tpu_custom_call.1} parent=0
    #allocation6 [shape = 'u8[4096]{0}', space=vmem, size = 0x1000, scoped, tag = 'input window, operand 4, single buffered']
    #allocation7 [shape = 's32[2]{0}', space=sflag, size = 0x8, scoped, tag = 'scoped memory for tpu_custom_call.1']
    #allocation8 [shape = 's32[2]{0}', space=sflag, size = 0x8, scoped, tag = 'scoped memory for tpu_custom_call.1']
    #allocation9 [shape = 'u8[8192]{0}', space=vmem, size = 0x2000, scoped, tag = 'input window, operand 5, single buffered']
    #allocation10 [shape = 's32[1]{0}', space=sflag, size = 0x4, scoped, tag = 'scoped memory for tpu_custom_call.1']
    #allocation11 [shape = 'u8[8192]{0}', space=vmem, size = 0x2000, scoped, tag = 'input window, operand 7, single buffered']
    #allocation12 [shape = 'u8[8192]{0}', space=vmem, size = 0x2000, scoped, tag = 'input window, operand 11, single buffered']
    #allocation13 [shape = 's32[1]{0}', space=sflag, size = 0x4, scoped, tag = 'scoped memory for tpu_custom_call.1']
    #allocation14 [shape = 'u8[8192]{0}', space=vmem, size = 0x2000, scoped, tag = 'input window, operand 12, single buffered']
    #allocation15 [shape = 'u8[8192]{0}', space=vmem, size = 0x2000, scoped, tag = 'input window, operand 13, single buffered']
    #allocation16 [shape = 's32[1]{0}', space=sflag, size = 0x4, scoped, tag = 'scoped memory for tpu_custom_call.1']
    #allocation17 [shape = 'u8[8192]{0}', space=vmem, size = 0x2000, scoped, tag = 'input window, operand 17, single buffered']
    #allocation18 [shape = 'u8[8192]{0}', space=vmem, size = 0x2000, scoped, tag = 'output window, operand 0']
    %26 = vsyncpa [#allocation7], 0
    %27 = vsyncpa [#allocation10], 0
    %28 = vsyncpa [#allocation13], 0
    %29 = vsyncpa [#allocation16], 0
    %30 = vsyncpa [#allocation8], 0
    %s31 = scalar_lea.sflag [#allocation8], 1
    %32 = vsyncpa %s31, 0
    loop: start=0, step=1, limit=6
    $region2: #{tpu_custom_call.1} parent=1 // loop_pre_header
      _
    $region3: #{tpu_custom_call.1} parent=1 // loop_header
      %s34 = sphi 0, %s38
      %p35 = scmp.ge.s32.totalorder %s34, 6
      %s41 = sphi 0, %s53
      %s42 = sphi 0, %s49
      %s43 = sphi 0, %s41
      %s44 = sphi 0, %s42
      %s45 = sphi 0, %s43
      %s46 = sphi 0, %s44
      %s58 = sphi 0, %s60
      %s61 = sphi 0, %s58
      %s62 = sphi 0, %s61
      %s78 = sphi 0, %s62
      %s84 = sphi 0, %s86
      %s87 = sphi 0, %s84
      %s88 = sphi 0, %s87
      %s104 = sphi 0, %s88
      %s110 = sphi 0, %s112
      %s113 = sphi 0, %s110
      %s114 = sphi 0, %s113
      %s130 = sphi 0, %s114
      %s136 = sphi 0, %s138
      %s139 = sphi 0, %s136
      %s140 = sphi 0, %s139
      %s156 = sphi 0, %s140
      %s160 = sphi 0, %s160
      %s162 = sphi 0, %s160
      %s163 = sphi 0, %s162
      %s177 = sphi 0, %s163
      %s181 = sphi 0, %s181
      %s183 = sphi 0, %s181
      %s184 = sphi 0, %s183
      %s198 = sphi 0, %s184
      %s202 = sphi 0, %s202
      %s204 = sphi 0, %s202
      %s205 = sphi 0, %s204
      %s219 = sphi 0, %s205
      %s223 = sphi 0, %s223
      %s225 = sphi 0, %s223
      %s226 = sphi 0, %s225
      %s240 = sphi 0, %s226
      %s244 = sphi 0, %s244
      %s246 = sphi 0, %s244
      %s247 = sphi 0, %s246
      %s261 = sphi 0, %s247
      %s265 = sphi 0, %s265
      %s267 = sphi 0, %s265
      %s268 = sphi 0, %s267
      %s282 = sphi 0, %s268
      %s286 = sphi 0, %s286
      %s288 = sphi 0, %s286
      %s289 = sphi 0, %s288
      %s303 = sphi 0, %s289
      %s307 = sphi 0, %s307
      %s309 = sphi 0, %s307
      %s310 = sphi 0, %s309
      %s324 = sphi 0, %s310
      %s328 = sphi 0, %s328
      %s330 = sphi 0, %s328
      %s331 = sphi 0, %s330
      %s345 = sphi 0, %s331
      %s349 = sphi 0, %s349
      %s351 = sphi 0, %s349
      %s352 = sphi 0, %s351
      %s366 = sphi 0, %s352
      %s370 = sphi 0, %s370
      %s372 = sphi 0, %s370
      %s373 = sphi 0, %s372
      %s387 = sphi 0, %s373
      %s391 = sphi 0, %s391
      %s393 = sphi 0, %s391
      %s394 = sphi 0, %s393
      %s408 = sphi 0, %s394
      %s412 = sphi 0, %s412
      %s414 = sphi 0, %s412
      %s415 = sphi 0, %s414
      %s429 = sphi 0, %s415
      %s433 = sphi 0, %s433
      %s435 = sphi 0, %s433
      %s436 = sphi 0, %s435
      %s450 = sphi 0, %s436
      %s454 = sphi 0, %s454
      %s456 = sphi 0, %s454
      %s457 = sphi 0, %s456
      %s471 = sphi 0, %s457
      %s475 = sphi 0, %s475
      %s477 = sphi 0, %s475
      %s478 = sphi 0, %s477
      %s492 = sphi 0, %s478
      %s496 = sphi 0, %s496
      %s498 = sphi 0, %s496
      %s499 = sphi 0, %s498
      %s513 = sphi 0, %s499
      %s521 = sphi 0, %s523
      %s524 = sphi 0, %s521
      %s525 = sphi 0, %s524
      %s541 = sphi 0, %s525
    $region4: #{tpu_custom_call.1} parent=1 // loop_header_branch
      %37 = sbr.rel (%p35) target = $region8
    $region5: #{tpu_custom_call.1} parent=1 // loop_body
      %s39 = ssub.s32 %s34, 1
      %s40 = ssub.s32 %s34, 2
      %s47 = sadd.s32 1, %s42
      %p48 = scmp.ge.s32.totalorder %s47, 2
      %s49 = scalar_select %p48, 0, %s47
      %s50 = sadd.s32 1, %s41
      %s51 = scalar_select %p48, %s50, %s41
      %p52 = scmp.ge.s32.totalorder %s51, 2
      %s53 = scalar_select %p52, 0, %s51
      %s54 = ssub.s32 %s41, %s53
      %s55 = ssub.s32 %s42, %s49
      %s56 = sor.u32 %s54, %s55
      %p57 = scmp.eq.s32.totalorder %s56, 0
      %s59 = sadd.s32 %s58, 1
      %s60 = scalar_select %p57, %s58, %s59
      %p63 = pneg %p57
      %p64 = scmp.eq.s32.totalorder %s34, 3
      %p65 = por %p63, %p64
      %p66 = scmp.ne.s32.totalorder %s58, %s61
      %p67 = scmp.eq.s32.totalorder %s34, 0
      %p68 = por %p66, %p67
      %p69 = scmp.ne.s32.totalorder %s58, %s61
      %p70 = scmp.eq.s32.totalorder %s39, 3
      %p71 = por %p69, %p70
      %p72 = scmp.ne.s32.totalorder %s61, %s62
      %p73 = scmp.eq.s32.totalorder %s39, 0
      %p74 = por %p72, %p73
      %p75 = scmp.ne.s32.totalorder %s61, %s62
      %p76 = scmp.eq.s32.totalorder %s40, 3
      %p77 = por %p75, %p76
      %p79 = scmp.ne.s32.totalorder %s62, %s78
      %p80 = scmp.eq.s32.totalorder %s40, 0
      %p81 = por %p79, %p80
      %s82 = ssub.s32 %s41, %s53
      %p83 = scmp.eq.s32.totalorder %s82, 0
      %s85 = sadd.s32 %s84, 1
      %s86 = scalar_select %p83, %s84, %s85
      %p89 = pneg %p83
      %p90 = scmp.eq.s32.totalorder %s34, 3
      %p91 = por %p89, %p90
      %p92 = scmp.ne.s32.totalorder %s84, %s87
      %p93 = scmp.eq.s32.totalorder %s34, 0
      %p94 = por %p92, %p93
      %p95 = scmp.ne.s32.totalorder %s84, %s87
      %p96 = scmp.eq.s32.totalorder %s39, 3
      %p97 = por %p95, %p96
      %p98 = scmp.ne.s32.totalorder %s87, %s88
      %p99 = scmp.eq.s32.totalorder %s39, 0
      %p100 = por %p98, %p99
      %p101 = scmp.ne.s32.totalorder %s87, %s88
      %p102 = scmp.eq.s32.totalorder %s40, 3
      %p103 = por %p101, %p102
      %p105 = scmp.ne.s32.totalorder %s88, %s104
      %p106 = scmp.eq.s32.totalorder %s40, 0
      %p107 = por %p105, %p106
      %s108 = ssub.s32 %s41, %s53
      %p109 = scmp.eq.s32.totalorder %s108, 0
      %s111 = sadd.s32 %s110, 1
      %s112 = scalar_select %p109, %s110, %s111
      %p115 = pneg %p109
      %p116 = scmp.eq.s32.totalorder %s34, 3
      %p117 = por %p115, %p116
      %p118 = scmp.ne.s32.totalorder %s110, %s113
      %p119 = scmp.eq.s32.totalorder %s34, 0
      %p120 = por %p118, %p119
      %p121 = scmp.ne.s32.totalorder %s110, %s113
      %p122 = scmp.eq.s32.totalorder %s39, 3
      %p123 = por %p121, %p122
      %p124 = scmp.ne.s32.totalorder %s113, %s114
      %p125 = scmp.eq.s32.totalorder %s39, 0
      %p126 = por %p124, %p125
      %p127 = scmp.ne.s32.totalorder %s113, %s114
      %p128 = scmp.eq.s32.totalorder %s40, 3
      %p129 = por %p127, %p128
      %p131 = scmp.ne.s32.totalorder %s114, %s130
      %p132 = scmp.eq.s32.totalorder %s40, 0
      %p133 = por %p131, %p132
      %s134 = ssub.s32 %s41, %s53
      %p135 = scmp.eq.s32.totalorder %s134, 0
      %s137 = sadd.s32 %s136, 1
      %s138 = scalar_select %p135, %s136, %s137
      %p141 = pneg %p135
      %p142 = scmp.eq.s32.totalorder %s34, 3
      %p143 = por %p141, %p142
      %p144 = scmp.ne.s32.totalorder %s136, %s139
      %p145 = scmp.eq.s32.totalorder %s34, 0
      %p146 = por %p144, %p145
      %p147 = scmp.ne.s32.totalorder %s136, %s139
      %p148 = scmp.eq.s32.totalorder %s39, 3
      %p149 = por %p147, %p148
      %p150 = scmp.ne.s32.totalorder %s139, %s140
      %p151 = scmp.eq.s32.totalorder %s39, 0
      %p152 = por %p150, %p151
      %p153 = scmp.ne.s32.totalorder %s139, %s140
      %p154 = scmp.eq.s32.totalorder %s40, 3
      %p155 = por %p153, %p154
      %p157 = scmp.ne.s32.totalorder %s140, %s156
      %p158 = scmp.eq.s32.totalorder %s40, 0
      %p159 = por %p157, %p158
      %s161 = sadd.s32 %s160, 1
      %p164 = scmp.eq.s32.totalorder %s34, 3
      %p165 = scmp.ne.s32.totalorder %s160, %s162
      %p166 = scmp.eq.s32.totalorder %s34, 0
      %p167 = por %p165, %p166
      %p168 = scmp.ne.s32.totalorder %s160, %s162
      %p169 = scmp.eq.s32.totalorder %s39, 3
      %p170 = por %p168, %p169
      %p171 = scmp.ne.s32.totalorder %s162, %s163
      %p172 = scmp.eq.s32.totalorder %s39, 0
      %p173 = por %p171, %p172
      %p174 = scmp.ne.s32.totalorder %s162, %s163
      %p175 = scmp.eq.s32.totalorder %s40, 3
      %p176 = por %p174, %p175
      %p178 = scmp.ne.s32.totalorder %s163, %s177
      %p179 = scmp.eq.s32.totalorder %s40, 0
      %p180 = por %p178, %p179
      %s182 = sadd.s32 %s181, 1
      %p185 = scmp.eq.s32.totalorder %s34, 3
      %p186 = scmp.ne.s32.totalorder %s181, %s183
      %p187 = scmp.eq.s32.totalorder %s34, 0
      %p188 = por %p186, %p187
      %p189 = scmp.ne.s32.totalorder %s181, %s183
      %p190 = scmp.eq.s32.totalorder %s39, 3
      %p191 = por %p189, %p190
      %p192 = scmp.ne.s32.totalorder %s183, %s184
      %p193 = scmp.eq.s32.totalorder %s39, 0
      %p194 = por %p192, %p193
      %p195 = scmp.ne.s32.totalorder %s183, %s184
      %p196 = scmp.eq.s32.totalorder %s40, 3
      %p197 = por %p195, %p196
      %p199 = scmp.ne.s32.totalorder %s184, %s198
      %p200 = scmp.eq.s32.totalorder %s40, 0
      %p201 = por %p199, %p200
      %s203 = sadd.s32 %s202, 1
      %p206 = scmp.eq.s32.totalorder %s34, 3
      %p207 = scmp.ne.s32.totalorder %s202, %s204
      %p208 = scmp.eq.s32.totalorder %s34, 0
      %p209 = por %p207, %p208
      %p210 = scmp.ne.s32.totalorder %s202, %s204
      %p211 = scmp.eq.s32.totalorder %s39, 3
      %p212 = por %p210, %p211
      %p213 = scmp.ne.s32.totalorder %s204, %s205
      %p214 = scmp.eq.s32.totalorder %s39, 0
      %p215 = por %p213, %p214
      %p216 = scmp.ne.s32.totalorder %s204, %s205
      %p217 = scmp.eq.s32.totalorder %s40, 3
      %p218 = por %p216, %p217
      %p220 = scmp.ne.s32.totalorder %s205, %s219
      %p221 = scmp.eq.s32.totalorder %s40, 0
      %p222 = por %p220, %p221
      %s224 = sadd.s32 %s223, 1
      %p227 = scmp.eq.s32.totalorder %s34, 3
      %p228 = scmp.ne.s32.totalorder %s223, %s225
      %p229 = scmp.eq.s32.totalorder %s34, 0
      %p230 = por %p228, %p229
      %p231 = scmp.ne.s32.totalorder %s223, %s225
      %p232 = scmp.eq.s32.totalorder %s39, 3
      %p233 = por %p231, %p232
      %p234 = scmp.ne.s32.totalorder %s225, %s226
      %p235 = scmp.eq.s32.totalorder %s39, 0
      %p236 = por %p234, %p235
      %p237 = scmp.ne.s32.totalorder %s225, %s226
      %p238 = scmp.eq.s32.totalorder %s40, 3
      %p239 = por %p237, %p238
      %p241 = scmp.ne.s32.totalorder %s226, %s240
      %p242 = scmp.eq.s32.totalorder %s40, 0
      %p243 = por %p241, %p242
      %s245 = sadd.s32 %s244, 1
      %p248 = scmp.eq.s32.totalorder %s34, 3
      %p249 = scmp.ne.s32.totalorder %s244, %s246
      %p250 = scmp.eq.s32.totalorder %s34, 0
      %p251 = por %p249, %p250
      %p252 = scmp.ne.s32.totalorder %s244, %s246
      %p253 = scmp.eq.s32.totalorder %s39, 3
      %p254 = por %p252, %p253
      %p255 = scmp.ne.s32.totalorder %s246, %s247
      %p256 = scmp.eq.s32.totalorder %s39, 0
      %p257 = por %p255, %p256
      %p258 = scmp.ne.s32.totalorder %s246, %s247
      %p259 = scmp.eq.s32.totalorder %s40, 3
      %p260 = por %p258, %p259
      %p262 = scmp.ne.s32.totalorder %s247, %s261
      %p263 = scmp.eq.s32.totalorder %s40, 0
      %p264 = por %p262, %p263
      %s266 = sadd.s32 %s265, 1
      %p269 = scmp.eq.s32.totalorder %s34, 3
      %p270 = scmp.ne.s32.totalorder %s265, %s267
      %p271 = scmp.eq.s32.totalorder %s34, 0
      %p272 = por %p270, %p271
      %p273 = scmp.ne.s32.totalorder %s265, %s267
      %p274 = scmp.eq.s32.totalorder %s39, 3
      %p275 = por %p273, %p274
      %p276 = scmp.ne.s32.totalorder %s267, %s268
      %p277 = scmp.eq.s32.totalorder %s39, 0
      %p278 = por %p276, %p277
      %p279 = scmp.ne.s32.totalorder %s267, %s268
      %p280 = scmp.eq.s32.totalorder %s40, 3
      %p281 = por %p279, %p280
      %p283 = scmp.ne.s32.totalorder %s268, %s282
      %p284 = scmp.eq.s32.totalorder %s40, 0
      %p285 = por %p283, %p284
      %s287 = sadd.s32 %s286, 1
      %p290 = scmp.eq.s32.totalorder %s34, 3
      %p291 = scmp.ne.s32.totalorder %s286, %s288
      %p292 = scmp.eq.s32.totalorder %s34, 0
      %p293 = por %p291, %p292
      %p294 = scmp.ne.s32.totalorder %s286, %s288
      %p295 = scmp.eq.s32.totalorder %s39, 3
      %p296 = por %p294, %p295
      %p297 = scmp.ne.s32.totalorder %s288, %s289
      %p298 = scmp.eq.s32.totalorder %s39, 0
      %p299 = por %p297, %p298
      %p300 = scmp.ne.s32.totalorder %s288, %s289
      %p301 = scmp.eq.s32.totalorder %s40, 3
      %p302 = por %p300, %p301
      %p304 = scmp.ne.s32.totalorder %s289, %s303
      %p305 = scmp.eq.s32.totalorder %s40, 0
      %p306 = por %p304, %p305
      %s308 = sadd.s32 %s307, 1
      %p311 = scmp.eq.s32.totalorder %s34, 3
      %p312 = scmp.ne.s32.totalorder %s307, %s309
      %p313 = scmp.eq.s32.totalorder %s34, 0
      %p314 = por %p312, %p313
      %p315 = scmp.ne.s32.totalorder %s307, %s309
      %p316 = scmp.eq.s32.totalorder %s39, 3
      %p317 = por %p315, %p316
      %p318 = scmp.ne.s32.totalorder %s309, %s310
      %p319 = scmp.eq.s32.totalorder %s39, 0
      %p320 = por %p318, %p319
      %p321 = scmp.ne.s32.totalorder %s309, %s310
      %p322 = scmp.eq.s32.totalorder %s40, 3
      %p323 = por %p321, %p322
      %p325 = scmp.ne.s32.totalorder %s310, %s324
      %p326 = scmp.eq.s32.totalorder %s40, 0
      %p327 = por %p325, %p326
      %s329 = sadd.s32 %s328, 1
      %p332 = scmp.eq.s32.totalorder %s34, 3
      %p333 = scmp.ne.s32.totalorder %s328, %s330
      %p334 = scmp.eq.s32.totalorder %s34, 0
      %p335 = por %p333, %p334
      %p336 = scmp.ne.s32.totalorder %s328, %s330
      %p337 = scmp.eq.s32.totalorder %s39, 3
      %p338 = por %p336, %p337
      %p339 = scmp.ne.s32.totalorder %s330, %s331
      %p340 = scmp.eq.s32.totalorder %s39, 0
      %p341 = por %p339, %p340
      %p342 = scmp.ne.s32.totalorder %s330, %s331
      %p343 = scmp.eq.s32.totalorder %s40, 3
      %p344 = por %p342, %p343
      %p346 = scmp.ne.s32.totalorder %s331, %s345
      %p347 = scmp.eq.s32.totalorder %s40, 0
      %p348 = por %p346, %p347
      %s350 = sadd.s32 %s349, 1
      %p353 = scmp.eq.s32.totalorder %s34, 3
      %p354 = scmp.ne.s32.totalorder %s349, %s351
      %p355 = scmp.eq.s32.totalorder %s34, 0
      %p356 = por %p354, %p355
      %p357 = scmp.ne.s32.totalorder %s349, %s351
      %p358 = scmp.eq.s32.totalorder %s39, 3
      %p359 = por %p357, %p358
      %p360 = scmp.ne.s32.totalorder %s351, %s352
      %p361 = scmp.eq.s32.totalorder %s39, 0
      %p362 = por %p360, %p361
      %p363 = scmp.ne.s32.totalorder %s351, %s352
      %p364 = scmp.eq.s32.totalorder %s40, 3
      %p365 = por %p363, %p364
      %p367 = scmp.ne.s32.totalorder %s352, %s366
      %p368 = scmp.eq.s32.totalorder %s40, 0
      %p369 = por %p367, %p368
      %s371 = sadd.s32 %s370, 1
      %p374 = scmp.eq.s32.totalorder %s34, 3
      %p375 = scmp.ne.s32.totalorder %s370, %s372
      %p376 = scmp.eq.s32.totalorder %s34, 0
      %p377 = por %p375, %p376
      %p378 = scmp.ne.s32.totalorder %s370, %s372
      %p379 = scmp.eq.s32.totalorder %s39, 3
      %p380 = por %p378, %p379
      %p381 = scmp.ne.s32.totalorder %s372, %s373
      %p382 = scmp.eq.s32.totalorder %s39, 0
      %p383 = por %p381, %p382
      %p384 = scmp.ne.s32.totalorder %s372, %s373
      %p385 = scmp.eq.s32.totalorder %s40, 3
      %p386 = por %p384, %p385
      %p388 = scmp.ne.s32.totalorder %s373, %s387
      %p389 = scmp.eq.s32.totalorder %s40, 0
      %p390 = por %p388, %p389
      %s392 = sadd.s32 %s391, 1
      %p395 = scmp.eq.s32.totalorder %s34, 3
      %p396 = scmp.ne.s32.totalorder %s391, %s393
      %p397 = scmp.eq.s32.totalorder %s34, 0
      %p398 = por %p396, %p397
      %p399 = scmp.ne.s32.totalorder %s391, %s393
      %p400 = scmp.eq.s32.totalorder %s39, 3
      %p401 = por %p399, %p400
      %p402 = scmp.ne.s32.totalorder %s393, %s394
      %p403 = scmp.eq.s32.totalorder %s39, 0
      %p404 = por %p402, %p403
      %p405 = scmp.ne.s32.totalorder %s393, %s394
      %p406 = scmp.eq.s32.totalorder %s40, 3
      %p407 = por %p405, %p406
      %p409 = scmp.ne.s32.totalorder %s394, %s408
      %p410 = scmp.eq.s32.totalorder %s40, 0
      %p411 = por %p409, %p410
      %s413 = sadd.s32 %s412, 1
      %p416 = scmp.eq.s32.totalorder %s34, 3
      %p417 = scmp.ne.s32.totalorder %s412, %s414
      %p418 = scmp.eq.s32.totalorder %s34, 0
      %p419 = por %p417, %p418
      %p420 = scmp.ne.s32.totalorder %s412, %s414
      %p421 = scmp.eq.s32.totalorder %s39, 3
      %p422 = por %p420, %p421
      %p423 = scmp.ne.s32.totalorder %s414, %s415
      %p424 = scmp.eq.s32.totalorder %s39, 0
      %p425 = por %p423, %p424
      %p426 = scmp.ne.s32.totalorder %s414, %s415
      %p427 = scmp.eq.s32.totalorder %s40, 3
      %p428 = por %p426, %p427
      %p430 = scmp.ne.s32.totalorder %s415, %s429
      %p431 = scmp.eq.s32.totalorder %s40, 0
      %p432 = por %p430, %p431
      %s434 = sadd.s32 %s433, 1
      %p437 = scmp.eq.s32.totalorder %s34, 3
      %p438 = scmp.ne.s32.totalorder %s433, %s435
      %p439 = scmp.eq.s32.totalorder %s34, 0
      %p440 = por %p438, %p439
      %p441 = scmp.ne.s32.totalorder %s433, %s435
      %p442 = scmp.eq.s32.totalorder %s39, 3
      %p443 = por %p441, %p442
      %p444 = scmp.ne.s32.totalorder %s435, %s436
      %p445 = scmp.eq.s32.totalorder %s39, 0
      %p446 = por %p444, %p445
      %p447 = scmp.ne.s32.totalorder %s435, %s436
      %p448 = scmp.eq.s32.totalorder %s40, 3
      %p449 = por %p447, %p448
      %p451 = scmp.ne.s32.totalorder %s436, %s450
      %p452 = scmp.eq.s32.totalorder %s40, 0
      %p453 = por %p451, %p452
      %s455 = sadd.s32 %s454, 1
      %p458 = scmp.eq.s32.totalorder %s34, 3
      %p459 = scmp.ne.s32.totalorder %s454, %s456
      %p460 = scmp.eq.s32.totalorder %s34, 0
      %p461 = por %p459, %p460
      %p462 = scmp.ne.s32.totalorder %s454, %s456
      %p463 = scmp.eq.s32.totalorder %s39, 3
      %p464 = por %p462, %p463
      %p465 = scmp.ne.s32.totalorder %s456, %s457
      %p466 = scmp.eq.s32.totalorder %s39, 0
      %p467 = por %p465, %p466
      %p468 = scmp.ne.s32.totalorder %s456, %s457
      %p469 = scmp.eq.s32.totalorder %s40, 3
      %p470 = por %p468, %p469
      %p472 = scmp.ne.s32.totalorder %s457, %s471
      %p473 = scmp.eq.s32.totalorder %s40, 0
      %p474 = por %p472, %p473
      %s476 = sadd.s32 %s475, 1
      %p479 = scmp.eq.s32.totalorder %s34, 3
      %p480 = scmp.ne.s32.totalorder %s475, %s477
      %p481 = scmp.eq.s32.totalorder %s34, 0
      %p482 = por %p480, %p481
      %p483 = scmp.ne.s32.totalorder %s475, %s477
      %p484 = scmp.eq.s32.totalorder %s39, 3
      %p485 = por %p483, %p484
      %p486 = scmp.ne.s32.totalorder %s477, %s478
      %p487 = scmp.eq.s32.totalorder %s39, 0
      %p488 = por %p486, %p487
      %p489 = scmp.ne.s32.totalorder %s477, %s478
      %p490 = scmp.eq.s32.totalorder %s40, 3
      %p491 = por %p489, %p490
      %p493 = scmp.ne.s32.totalorder %s478, %s492
      %p494 = scmp.eq.s32.totalorder %s40, 0
      %p495 = por %p493, %p494
      %s497 = sadd.s32 %s496, 1
      %p500 = scmp.eq.s32.totalorder %s34, 3
      %p501 = scmp.ne.s32.totalorder %s496, %s498
      %p502 = scmp.eq.s32.totalorder %s34, 0
      %p503 = por %p501, %p502
      %p504 = scmp.ne.s32.totalorder %s496, %s498
      %p505 = scmp.eq.s32.totalorder %s39, 3
      %p506 = por %p504, %p505
      %p507 = scmp.ne.s32.totalorder %s498, %s499
      %p508 = scmp.eq.s32.totalorder %s39, 0
      %p509 = por %p507, %p508
      %p510 = scmp.ne.s32.totalorder %s498, %s499
      %p511 = scmp.eq.s32.totalorder %s40, 3
      %p512 = por %p510, %p511
      %p514 = scmp.ne.s32.totalorder %s499, %s513
      %p515 = scmp.eq.s32.totalorder %s40, 0
      %p516 = por %p514, %p515
      %s517 = ssub.s32 %s41, %s53
      %s518 = ssub.s32 %s42, %s49
      %s519 = sor.u32 %s517, %s518
      %p520 = scmp.eq.s32.totalorder %s519, 0
      %s522 = sadd.s32 %s521, 1
      %s523 = scalar_select %p520, %s521, %s522
      %p526 = pneg %p520
      %p527 = scmp.eq.s32.totalorder %s34, 3
      %p528 = por %p526, %p527
      %p529 = scmp.ne.s32.totalorder %s521, %s524
      %p530 = scmp.eq.s32.totalorder %s34, 0
      %p531 = por %p529, %p530
      %p532 = scmp.ne.s32.totalorder %s521, %s524
      %p533 = scmp.eq.s32.totalorder %s39, 3
      %p534 = por %p532, %p533
      %p535 = scmp.ne.s32.totalorder %s524, %s525
      %p536 = scmp.eq.s32.totalorder %s39, 0
      %p537 = por %p535, %p536
      %p538 = scmp.ne.s32.totalorder %s524, %s525
      %p539 = scmp.eq.s32.totalorder %s40, 3
      %p540 = por %p538, %p539
      %p542 = scmp.ne.s32.totalorder %s525, %s541
      %p543 = scmp.eq.s32.totalorder %s40, 0
      %p544 = por %p542, %p543
      %p545 = scmp.le.s32.totalorder 1, %s34
      %p546 = scmp.lt.s32.totalorder %s34, 5
      %p547 = pnand %p545, %p546
      %p548 = pneg %p547
      // Predicated region
      $region9: #{tpu_custom_call.1} parent=5 // pred_check
        _
      $region10: #{tpu_custom_call.1} parent=5 // pred_check_branch
        %550 = sbr.rel (%p547) target = $region12
      $region11: #{tpu_custom_call.1} parent=5 // pred_region
        %s551 = ssub.s32 %s34, 1
        // Predicated region
        $region13: #{tpu_custom_call.1} parent=11 // pred_check
          %p552 = pneg %p173
        $region14: #{tpu_custom_call.1} parent=11 // pred_check_branch
          %554 = sbr.rel (%p552) target = $region16
        $region15: #{tpu_custom_call.1} parent=11 // pred_region
          %556 = vsyncadd [#allocation7], 0
          %s558 = sshll.u32 %s4, 4
          %s559 = int_to_ptr.hbm [resolvable:$true] %s558
          %s560 = sshll.u32 [#allocation6], 4
          %s561 = int_to_ptr.vmem [resolvable:$true] %s560
          %563 = dma.hbm_to_vmem [thread:$0]  %s559, 128, %s561, [#allocation7]
        $region16: #{tpu_custom_call.1} parent=11 // pred_fallthru
          _
        // Predicated region
        $region17: #{tpu_custom_call.1} parent=11 // pred_check
          %p564 = pneg %p194
        $region18: #{tpu_custom_call.1} parent=11 // pred_check_branch
          %566 = sbr.rel (%p564) target = $region20
        $region19: #{tpu_custom_call.1} parent=11 // pred_region
          %568 = vsyncadd [#allocation10], 0
          %s569 = sshll.u32 %s5, 4
          %s570 = int_to_ptr.hbm [resolvable:$true] %s569
          %s571 = sshll.u32 [#allocation9], 4
          %s572 = int_to_ptr.vmem [resolvable:$true] %s571
          %577 = dma.hbm_to_vmem [thread:$0]  %s570, 256, %s572, [#allocation10], 64, 64, 4
        $region20: #{tpu_custom_call.1} parent=11 // pred_fallthru
          _
        // Predicated region
        $region21: #{tpu_custom_call.1} parent=11 // pred_check
          %p578 = pneg %p215
        $region22: #{tpu_custom_call.1} parent=11 // pred_check_branch
          %580 = sbr.rel (%p578) target = $region24
        $region23: #{tpu_custom_call.1} parent=11 // pred_region
          _
        $region24: #{tpu_custom_call.1} parent=11 // pred_fallthru
          _
        // Predicated region
        $region25: #{tpu_custom_call.1} parent=11 // pred_check
          %p581 = pneg %p236
        $region26: #{tpu_custom_call.1} parent=11 // pred_check_branch
          %583 = sbr.rel (%p581) target = $region28
        $region27: #{tpu_custom_call.1} parent=11 // pred_region
          %585 = vsyncadd [#allocation10], 0
          %s586 = sshll.u32 %s7, 4
          %s587 = int_to_ptr.hbm [resolvable:$true] %s586
          %s588 = sshll.u32 [#allocation11], 4
          %s589 = int_to_ptr.vmem [resolvable:$true] %s588
          %594 = dma.hbm_to_vmem [thread:$0]  %s587, 256, %s589, [#allocation10], 64, 64, 4
        $region28: #{tpu_custom_call.1} parent=11 // pred_fallthru
          _
        // Predicated region
        $region29: #{tpu_custom_call.1} parent=11 // pred_check
          %p595 = pneg %p257
        $region30: #{tpu_custom_call.1} parent=11 // pred_check_branch
          %597 = sbr.rel (%p595) target = $region32
        $region31: #{tpu_custom_call.1} parent=11 // pred_region
          _
        $region32: #{tpu_custom_call.1} parent=11 // pred_fallthru
          _
        // Predicated region
        $region33: #{tpu_custom_call.1} parent=11 // pred_check
          %p598 = pneg %p278
        $region34: #{tpu_custom_call.1} parent=11 // pred_check_branch
          %600 = sbr.rel (%p598) target = $region36
        $region35: #{tpu_custom_call.1} parent=11 // pred_region
          _
        $region36: #{tpu_custom_call.1} parent=11 // pred_fallthru
          _
        // Predicated region
        $region37: #{tpu_custom_call.1} parent=11 // pred_check
          %p601 = pneg %p299
        $region38: #{tpu_custom_call.1} parent=11 // pred_check_branch
          %603 = sbr.rel (%p601) target = $region40
        $region39: #{tpu_custom_call.1} parent=11 // pred_region
          _
        $region40: #{tpu_custom_call.1} parent=11 // pred_fallthru
          _
        // Predicated region
        $region41: #{tpu_custom_call.1} parent=11 // pred_check
          %p604 = pneg %p320
        $region42: #{tpu_custom_call.1} parent=11 // pred_check_branch
          %606 = sbr.rel (%p604) target = $region44
        $region43: #{tpu_custom_call.1} parent=11 // pred_region
          %608 = vsyncadd [#allocation13], 0
          %s609 = sshll.u32 %s11, 4
          %s610 = int_to_ptr.hbm [resolvable:$true] %s609
          %s611 = sshll.u32 [#allocation12], 4
          %s612 = int_to_ptr.vmem [resolvable:$true] %s611
          %617 = dma.hbm_to_vmem [thread:$0]  %s610, 256, %s612, [#allocation13], 64, 64, 4
        $region44: #{tpu_custom_call.1} parent=11 // pred_fallthru
          _
        // Predicated region
        $region45: #{tpu_custom_call.1} parent=11 // pred_check
          %p618 = pneg %p341
        $region46: #{tpu_custom_call.1} parent=11 // pred_check_branch
          %620 = sbr.rel (%p618) target = $region48
        $region47: #{tpu_custom_call.1} parent=11 // pred_region
          %622 = vsyncadd [#allocation13], 0
          %s623 = sshll.u32 %s12, 4
          %s624 = int_to_ptr.hbm [resolvable:$true] %s623
          %s625 = sshll.u32 [#allocation14], 4
          %s626 = int_to_ptr.vmem [resolvable:$true] %s625
          %631 = dma.hbm_to_vmem [thread:$0]  %s624, 256, %s626, [#allocation13], 64, 64, 4
        $region48: #{tpu_custom_call.1} parent=11 // pred_fallthru
          _
        // Predicated region
        $region49: #{tpu_custom_call.1} parent=11 // pred_check
          %p632 = pneg %p362
        $region50: #{tpu_custom_call.1} parent=11 // pred_check_branch
          %634 = sbr.rel (%p632) target = $region52
        $region51: #{tpu_custom_call.1} parent=11 // pred_region
          %636 = vsyncadd [#allocation16], 0
          %s637 = sshll.u32 %s13, 4
          %s638 = int_to_ptr.hbm [resolvable:$true] %s637
          %s639 = sshll.u32 [#allocation15], 4
          %s640 = int_to_ptr.vmem [resolvable:$true] %s639
          %645 = dma.hbm_to_vmem [thread:$0]  %s638, 256, %s640, [#allocation16], 64, 64, 4
        $region52: #{tpu_custom_call.1} parent=11 // pred_fallthru
          _
        // Predicated region
        $region53: #{tpu_custom_call.1} parent=11 // pred_check
          %p646 = pneg %p383
        $region54: #{tpu_custom_call.1} parent=11 // pred_check_branch
          %648 = sbr.rel (%p646) target = $region56
        $region55: #{tpu_custom_call.1} parent=11 // pred_region
          _
        $region56: #{tpu_custom_call.1} parent=11 // pred_fallthru
          _
        // Predicated region
        $region57: #{tpu_custom_call.1} parent=11 // pred_check
          %p649 = pneg %p404
        $region58: #{tpu_custom_call.1} parent=11 // pred_check_branch
          %651 = sbr.rel (%p649) target = $region60
        $region59: #{tpu_custom_call.1} parent=11 // pred_region
          _
        $region60: #{tpu_custom_call.1} parent=11 // pred_fallthru
          _
        // Predicated region
        $region61: #{tpu_custom_call.1} parent=11 // pred_check
          %p652 = pneg %p425
        $region62: #{tpu_custom_call.1} parent=11 // pred_check_branch
          %654 = sbr.rel (%p652) target = $region64
        $region63: #{tpu_custom_call.1} parent=11 // pred_region
          _
        $region64: #{tpu_custom_call.1} parent=11 // pred_fallthru
          _
        // Predicated region
        $region65: #{tpu_custom_call.1} parent=11 // pred_check
          %p655 = pneg %p446
        $region66: #{tpu_custom_call.1} parent=11 // pred_check_branch
          %657 = sbr.rel (%p655) target = $region68
        $region67: #{tpu_custom_call.1} parent=11 // pred_region
          %659 = vsyncadd [#allocation16], 0
          %s660 = sshll.u32 %s17, 4
          %s661 = int_to_ptr.hbm [resolvable:$true] %s660
          %s662 = sshll.u32 [#allocation17], 4
          %s663 = int_to_ptr.vmem [resolvable:$true] %s662
          %668 = dma.hbm_to_vmem [thread:$0]  %s661, 256, %s663, [#allocation16], 64, 64, 4
        $region68: #{tpu_custom_call.1} parent=11 // pred_fallthru
          _
        // Predicated region
        $region69: #{tpu_custom_call.1} parent=11 // pred_check
          %p669 = pneg %p467
        $region70: #{tpu_custom_call.1} parent=11 // pred_check_branch
          %671 = sbr.rel (%p669) target = $region72
        $region71: #{tpu_custom_call.1} parent=11 // pred_region
          _
        $region72: #{tpu_custom_call.1} parent=11 // pred_fallthru
          _
        // Predicated region
        $region73: #{tpu_custom_call.1} parent=11 // pred_check
          %p672 = pneg %p488
        $region74: #{tpu_custom_call.1} parent=11 // pred_check_branch
          %674 = sbr.rel (%p672) target = $region76
        $region75: #{tpu_custom_call.1} parent=11 // pred_region
          _
        $region76: #{tpu_custom_call.1} parent=11 // pred_fallthru
          _
        // Predicated region
        $region77: #{tpu_custom_call.1} parent=11 // pred_check
          %p675 = pneg %p509
        $region78: #{tpu_custom_call.1} parent=11 // pred_check_branch
          %677 = sbr.rel (%p675) target = $region80
        $region79: #{tpu_custom_call.1} parent=11 // pred_region
          _
        $region80: #{tpu_custom_call.1} parent=11 // pred_fallthru
          _
      $region12: #{tpu_custom_call.1} parent=5 // pred_fallthru
        _
      %p678 = scmp.lt.s32.totalorder %s34, 4
      // Predicated region
      $region81: #{tpu_custom_call.1} parent=5 // pred_check
        %p679 = pneg %p678
      $region82: #{tpu_custom_call.1} parent=5 // pred_check_branch
        %681 = sbr.rel (%p679) target = $region84
      $region83: #{tpu_custom_call.1} parent=5 // pred_region
        // Predicated region
        $region85: #{tpu_custom_call.1} parent=83 // pred_check
          %p682 = pneg %p68
        $region86: #{tpu_custom_call.1} parent=83 // pred_check_branch
          %684 = sbr.rel (%p682) target = $region88
        $region87: #{tpu_custom_call.1} parent=83 // pred_region
          %p685 = scmp.lt.s32.totalorder %s41, 1
          %s686 = scalar_select %p685, %s41, 1
          %p687 = scmp.lt.s32.totalorder %s42, 1
          %s688 = scalar_select %p687, %s42, 1
          %s689 = smul.addr %s686, 2
          %s690 = sadd.s32 %s688, %s689
          %s691 = smul.addr %s690, 8
          %s692 = scalar_lea.vmem %s0, %s691
        $region88: #{tpu_custom_call.1} parent=83 // pred_fallthru
          _
        // Predicated region
        $region89: #{tpu_custom_call.1} parent=83 // pred_check
          %p693 = pneg %p94
        $region90: #{tpu_custom_call.1} parent=83 // pred_check_branch
          %695 = sbr.rel (%p693) target = $region92
        $region91: #{tpu_custom_call.1} parent=83 // pred_region
          %p696 = scmp.lt.s32.totalorder %s41, 1
          %s697 = scalar_select %p696, %s41, 1
          %s698 = smul.addr %s697, 2
          %s699 = smul.addr %s698, 8
          %s700 = scalar_lea.vmem %s1, %s699
        $region92: #{tpu_custom_call.1} parent=83 // pred_fallthru
          _
        // Predicated region
        $region93: #{tpu_custom_call.1} parent=83 // pred_check
          %p701 = pneg %p120
        $region94: #{tpu_custom_call.1} parent=83 // pred_check_branch
          %703 = sbr.rel (%p701) target = $region96
        $region95: #{tpu_custom_call.1} parent=83 // pred_region
          %p704 = scmp.lt.s32.totalorder %s41, 1
          %s705 = scalar_select %p704, %s41, 1
          %s706 = smul.addr %s705, 8
          %s707 = scalar_lea.vmem %s2, %s706
        $region96: #{tpu_custom_call.1} parent=83 // pred_fallthru
          _
        // Predicated region
        $region97: #{tpu_custom_call.1} parent=83 // pred_check
          %p708 = pneg %p146
        $region98: #{tpu_custom_call.1} parent=83 // pred_check_branch
          %710 = sbr.rel (%p708) target = $region100
        $region99: #{tpu_custom_call.1} parent=83 // pred_region
          %p711 = scmp.lt.s32.totalorder %s41, 1
          %s712 = scalar_select %p711, %s41, 1
          %s713 = smul.addr %s712, 8
          %s714 = scalar_lea.vmem %s3, %s713
        $region100: #{tpu_custom_call.1} parent=83 // pred_fallthru
          _
      $region84: #{tpu_custom_call.1} parent=5 // pred_fallthru
        _
      %p715 = scmp.le.s32.totalorder 1, %s34
      %p716 = scmp.lt.s32.totalorder %s34, 5
      %p717 = pnand %p715, %p716
      %p718 = pneg %p717
      // Predicated region
      $region101: #{tpu_custom_call.1} parent=5 // pred_check
        _
      $region102: #{tpu_custom_call.1} parent=5 // pred_check_branch
        %720 = sbr.rel (%p717) target = $region104
      $region103: #{tpu_custom_call.1} parent=5 // pred_region
        %s721 = ssub.s32 %s34, 1
        // Predicated region
        $region105: #{tpu_custom_call.1} parent=103 // pred_check
          %p722 = pneg %p173
        $region106: #{tpu_custom_call.1} parent=103 // pred_check_branch
          %724 = sbr.rel (%p722) target = $region108
        $region107: #{tpu_custom_call.1} parent=103 // pred_region
          %726 = dma.done [#allocation7], 128
        $region108: #{tpu_custom_call.1} parent=103 // pred_fallthru
          _
        // Predicated region
        $region109: #{tpu_custom_call.1} parent=103 // pred_check
          %p727 = pneg %p194
        $region110: #{tpu_custom_call.1} parent=103 // pred_check_branch
          %729 = sbr.rel (%p727) target = $region112
        $region111: #{tpu_custom_call.1} parent=103 // pred_region
          %731 = dma.done [#allocation10], 256
        $region112: #{tpu_custom_call.1} parent=103 // pred_fallthru
          _
        // Predicated region
        $region113: #{tpu_custom_call.1} parent=103 // pred_check
          %p732 = pneg %p236
        $region114: #{tpu_custom_call.1} parent=103 // pred_check_branch
          %734 = sbr.rel (%p732) target = $region116
        $region115: #{tpu_custom_call.1} parent=103 // pred_region
          %736 = dma.done [#allocation10], 256
        $region116: #{tpu_custom_call.1} parent=103 // pred_fallthru
          _
        // Predicated region
        $region117: #{tpu_custom_call.1} parent=103 // pred_check
          %p737 = pneg %p320
        $region118: #{tpu_custom_call.1} parent=103 // pred_check_branch
          %739 = sbr.rel (%p737) target = $region120
        $region119: #{tpu_custom_call.1} parent=103 // pred_region
          %741 = dma.done [#allocation13], 256
        $region120: #{tpu_custom_call.1} parent=103 // pred_fallthru
          _
        // Predicated region
        $region121: #{tpu_custom_call.1} parent=103 // pred_check
          %p742 = pneg %p341
        $region122: #{tpu_custom_call.1} parent=103 // pred_check_branch
          %744 = sbr.rel (%p742) target = $region124
        $region123: #{tpu_custom_call.1} parent=103 // pred_region
          %746 = dma.done [#allocation13], 256
        $region124: #{tpu_custom_call.1} parent=103 // pred_fallthru
          _
        // Predicated region
        $region125: #{tpu_custom_call.1} parent=103 // pred_check
          %p747 = pneg %p362
        $region126: #{tpu_custom_call.1} parent=103 // pred_check_branch
          %749 = sbr.rel (%p747) target = $region128
        $region127: #{tpu_custom_call.1} parent=103 // pred_region
          %751 = dma.done [#allocation16], 256
        $region128: #{tpu_custom_call.1} parent=103 // pred_fallthru
          _
        // Predicated region
        $region129: #{tpu_custom_call.1} parent=103 // pred_check
          %p752 = pneg %p446
        $region130: #{tpu_custom_call.1} parent=103 // pred_check_branch
          %754 = sbr.rel (%p752) target = $region132
        $region131: #{tpu_custom_call.1} parent=103 // pred_region
          %756 = dma.done [#allocation16], 256
        $region132: #{tpu_custom_call.1} parent=103 // pred_fallthru
          _
        %p757 = scmp.lt.s32.totalorder %s43, 1
        %s758 = scalar_select %p757, %s43, 1
        %p759 = scmp.lt.s32.totalorder %s44, 1
        %s760 = scalar_select %p759, %s44, 1
        %s761 = smul.addr %s758, 2
        %s762 = sadd.s32 %s760, %s761
        %s763 = smul.addr %s762, 8
        %s764 = scalar_lea.vmem %s0, %s763
        %p765 = pneg %p74
        %p766 = pneg %p71
        %p767 = scmp.lt.s32.totalorder %s43, 1
        %s768 = scalar_select %p767, %s43, 1
        %s769 = smul.addr %s768, 2
        %s770 = smul.addr %s769, 8
        %s771 = scalar_lea.vmem %s1, %s770
        %p772 = pneg %p100
        %p773 = pneg %p97
        %p774 = scmp.lt.s32.totalorder %s43, 1
        %s775 = scalar_select %p774, %s43, 1
        %s776 = smul.addr %s775, 8
        %s777 = scalar_lea.vmem %s2, %s776
        %p778 = pneg %p126
        %p779 = pneg %p123
        %p780 = scmp.lt.s32.totalorder %s43, 1
        %s781 = scalar_select %p780, %s43, 1
        %s782 = smul.addr %s781, 8
        %s783 = scalar_lea.vmem %s3, %s782
        %p784 = pneg %p152
        %p785 = pneg %p149
        %p786 = pneg %p173
        %p787 = pneg %p170
        %p788 = pneg %p194
        %p789 = pneg %p191
        %p790 = pneg %p215
        %p791 = pneg %p212
        %p792 = pneg %p236
        %p793 = pneg %p233
        %p794 = pneg %p257
        %p795 = pneg %p254
        %p796 = pneg %p278
        %p797 = pneg %p275
        %p798 = pneg %p299
        %p799 = pneg %p296
        %p800 = pneg %p320
        %p801 = pneg %p317
        %p802 = pneg %p341
        %p803 = pneg %p338
        %p804 = pneg %p362
        %p805 = pneg %p359
        %p806 = pneg %p383
        %p807 = pneg %p380
        %p808 = pneg %p404
        %p809 = pneg %p401
        %p810 = pneg %p425
        %p811 = pneg %p422
        %p812 = pneg %p446
        %p813 = pneg %p443
        %p814 = pneg %p467
        %p815 = pneg %p464
        %p816 = pneg %p488
        %p817 = pneg %p485
        %p818 = pneg %p509
        %p819 = pneg %p506
        %p820 = pneg %p537
        %p821 = pneg %p534
        %s822 = sand.u32 %s524, 1
        %s823 = scalar_lea.sflag [#allocation8], %s822
        %s824 = sand.u32 %s524, 1
        %s825 = smul.addr %s824, 8
        %s826 = scalar_lea.vmem [#allocation18], %s825
        %p827 = scmp.lt.s32.totalorder %s43, 1
        %s828 = scalar_select %p827, %s43, 1
        %p829 = scmp.lt.s32.totalorder %s44, 1
        %s830 = scalar_select %p829, %s44, 1
        %s831 = smul.addr %s828, 2
        %s832 = sadd.s32 %s830, %s831
        %s833 = smul.addr %s832, 8
        %s834 = scalar_lea.vmem %s0, %s833
        %p835 = scmp.lt.s32.totalorder %s43, 1
        %s836 = scalar_select %p835, %s43, 1
        %s837 = smul.addr %s836, 2
        %s838 = smul.addr %s837, 8
        %s839 = scalar_lea.vmem %s1, %s838
        %p840 = scmp.lt.s32.totalorder %s43, 1
        %s841 = scalar_select %p840, %s43, 1
        %s842 = smul.addr %s841, 8
        %s843 = scalar_lea.vmem %s2, %s842
        %p844 = scmp.lt.s32.totalorder %s43, 1
        %s845 = scalar_select %p844, %s43, 1
        %s846 = smul.addr %s845, 8
        %s847 = scalar_lea.vmem %s3, %s846
        %v849 = vld [vmem:[#allocation6] sm:$0x3f]
        %v850 = vld [vmem:[%s847] sm:$0x3f]
        %v851 = vadd.f32 %v849, %v850
        %v852 = vadd.f32 %v851, 1.0
        %p853 = scmp.eq.s32.totalorder %s44, 0
        // Predicated region
        $region133: #{tpu_custom_call.1} parent=103 // pred_check
          %p854 = pneg %p853
        $region134: #{tpu_custom_call.1} parent=103 // pred_check_branch
          %856 = sbr.rel (%p854) target = $region136
        $region135: #{tpu_custom_call.1} parent=103 // pred_region
          %v857 = vld [vmem:[%s839] sm:$0xff]
          %v858 = vld [vmem:[%s839 + $0x8] sm:$0xff]
          %vm859 = vcmask 261120
          %v860 = vsel %vm859, %v857, 0.0
          %861 = vadd.xlane.f32.xlu0 %v860
          %v862 = vpop.xlane.xlu0 %861
          %v863 = vsel %vm859, %v858, 0.0
          %864 = vadd.xlane.f32.xlu0 %v863
          %v865 = vpop.xlane.xlu0 %864
          %v866 = vrcp.pop 32.0
          %v867 = vmul.f32 32.0, %v866
          %v868 = vsub.f32 1.0, %v867
          %v869 = vmul.f32 %v866, %v868
          %v870 = vadd.f32 %v866, %v869
          %vm871 = vweird.f32 %v866
          %v872 = vsel %vm871, %v866, %v870
          %v873 = vmul.f32 %v862, %v872
          %v874 = vmul.f32 %v865, %v872
          %v875 = vsub.f32 %v857, %v873
          %v876 = vsub.f32 %v858, %v874
          %v877 = vmul.f32 %v875, %v875
          %v878 = vmul.f32 %v876, %v876
          %v879 = vsel %vm859, %v877, 0.0
          %880 = vadd.xlane.f32.xlu0 %v879
          %v881 = vpop.xlane.xlu0 %880
          %v882 = vsel %vm859, %v878, 0.0
          %883 = vadd.xlane.f32.xlu0 %v882
          %v884 = vpop.xlane.xlu0 %883
          %v885 = vmul.f32 %v881, %v872
          %v886 = vmul.f32 %v884, %v872
          %v887 = vadd.f32 %v885, 1e-06
          %v888 = vadd.f32 %v886, 1e-06
          %v889 = vrsqrt.pop %v887
          %v890 = vmul.f32 %v889, %v887
          %v891 = vmul.f32 %v890, %v889
          %v892 = vmul.f32 0.5, %v891
          %v893 = vsub.f32 1.5, %v892
          %v894 = vmul.f32 %v889, %v893
          %vm895 = vweird.f32 %v887
          %vm896 = vweird.f32 %v889
          %vm897 = vmor %vm895, %vm896
          %v898 = vsel %vm897, %v889, %v894
          %v899 = vrsqrt.pop %v888
          %v900 = vmul.f32 %v899, %v888
          %v901 = vmul.f32 %v900, %v899
          %v902 = vmul.f32 0.5, %v901
          %v903 = vsub.f32 1.5, %v902
          %v904 = vmul.f32 %v899, %v903
          %vm905 = vweird.f32 %v888
          %vm906 = vweird.f32 %v899
          %vm907 = vmor %vm905, %vm906
          %v908 = vsel %vm907, %v899, %v904
          %v909 = vmul.f32 %v875, %v898
          %v910 = vmul.f32 %v876, %v908
          %v911 = vperm.slane %v852, 1
          %v912 = vmul.f32 %v909, %v911
          %v913 = vmul.f32 %v910, %v911
          %v914 = vperm.slane %v851, 0
          %v915 = vadd.f32 %v912, %v914
          %v916 = vadd.f32 %v913, %v914
          %v917 = vpack.c.bf16 %v916, %v915
          %v918 = vld [vmem:[%s6] sm:$0xf]
          %v919 = vld [vmem:[%s6 + $0x4] sm:$0xf]
          %v920 = vld [vmem:[%s6 + $0x8] sm:$0xf]
          %v921 = vld [vmem:[%s6 + $0xc] sm:$0xf]
          %v922 = vld [vmem:[%s9] sm:$0x1]
          %v924 = vperm.slane %v922, 0
          %v930 = vunpack.c.l.b16 %v918
          %v931 = vunpack.c.l.b16 %v919
          %v932 = vunpack.c.l.b16 %v920
          %v933 = vunpack.c.l.b16 %v921
          %v934 = vpack.c.b16 %v931, %v930
          %v935 = vpack.c.b16 %v933, %v932
          %v939 = vsel %vm859, %v917, 0
          %941 = vmatpush.bf16.msra.mxu0 0
          %942 = vmatpush.bf16.msra.mxu0 0
          %943 = vmatpush.bf16.msra.mxu0 0
          %944 = vmatpush.bf16.msra.mxu0 0
          %945 = vmatpush.bf16.msra.mxu0 0
          %946 = vmatpush.bf16.msra.mxu0 0
          %947 = vmatpush.bf16.msra.mxu0 %v935
          %948 = vmatpush.bf16.msra.mxu0 %v934
          %949 = vmatmul.bf16.gmra.mxu0 %v939
          %v950 = vpop.f32.mrf.mxu0
          %v951 = vadd.f32 %v924, %v950
          %v952 = vpop.f32.mrf.mxu0
          %v953 = vadd.f32 %v924, %v952
          %954 = vdwg.mxu0
          %957 = vrot.lane.b32.xlu0 %v951, 120
          %v958 = vpop.permute.xlu0 %957
          %959 = vrot.lane.b32.xlu0 %v953, 120
          %v960 = vpop.permute.xlu0 %959
          %963 = vrot.lane.b32.xlu0 %v951, 112
          %v964 = vpop.permute.xlu0 %963
          %965 = vrot.lane.b32.xlu0 %v953, 112
          %v966 = vpop.permute.xlu0 %965
          %969 = vrot.lane.b32.xlu0 %v951, 104
          %v970 = vpop.permute.xlu0 %969
          %971 = vrot.lane.b32.xlu0 %v953, 104
          %v972 = vpop.permute.xlu0 %971
          %v975 = vpack.c.bf16 %v951, %v951
          %v976 = vpack.c.bf16 %v953, %v953
          %v977 = vpack.c.bf16 %v958, %v958
          %v978 = vpack.c.bf16 %v960, %v960
          %v979 = vpack.c.bf16 %v964, %v964
          %v980 = vpack.c.bf16 %v966, %v966
          %v981 = vpack.c.bf16 %v970, %v970
          %v982 = vpack.c.bf16 %v972, %v972
          %vm983 = vcmask 60416
          %984 = vst.msk [vmem:[#allocation2] sm:$0xf] %vm983, %v975
          %985 = vst.msk [vmem:[#allocation2 + $0x4] sm:$0xf] %vm983, %v976
          %986 = vst.msk [vmem:[#allocation2 + $0x8] sm:$0xf] %vm983, %v977
          %987 = vst.msk [vmem:[#allocation2 + $0xc] sm:$0xf] %vm983, %v978
          %988 = vst.msk [vmem:[#allocation2 + $0x10] sm:$0xf] %vm983, %v979
          %989 = vst.msk [vmem:[#allocation2 + $0x14] sm:$0xf] %vm983, %v980
          %990 = vst.msk [vmem:[#allocation2 + $0x18] sm:$0xf] %vm983, %v981
          %991 = vst.msk [vmem:[#allocation2 + $0x1c] sm:$0xf] %vm983, %v982
          %1000 = vrot.lane.b32.xlu0 %v975, 96
          %v1001 = vpop.permute.xlu0 %1000
          %1002 = vrot.lane.b32.xlu0 %v976, 96
          %v1003 = vpop.permute.xlu0 %1002
          %1004 = vrot.lane.b32.xlu0 %v977, 96
          %v1005 = vpop.permute.xlu0 %1004
          %1006 = vrot.lane.b32.xlu0 %v978, 96
          %v1007 = vpop.permute.xlu0 %1006
          %1008 = vrot.lane.b32.xlu0 %v979, 96
          %v1009 = vpop.permute.xlu0 %1008
          %1010 = vrot.lane.b32.xlu0 %v980, 96
          %v1011 = vpop.permute.xlu0 %1010
          %1012 = vrot.lane.b32.xlu0 %v981, 96
          %v1013 = vpop.permute.xlu0 %1012
          %1014 = vrot.lane.b32.xlu0 %v982, 96
          %v1015 = vpop.permute.xlu0 %1014
          %1024 = vst.msk [vmem:[#allocation3] sm:$0xf] %vm983, %v1001
          %1025 = vst.msk [vmem:[#allocation3 + $0x4] sm:$0xf] %vm983, %v1003
          %1026 = vst.msk [vmem:[#allocation3 + $0x8] sm:$0xf] %vm983, %v1005
          %1027 = vst.msk [vmem:[#allocation3 + $0xc] sm:$0xf] %vm983, %v1007
          %1028 = vst.msk [vmem:[#allocation3 + $0x10] sm:$0xf] %vm983, %v1009
          %1029 = vst.msk [vmem:[#allocation3 + $0x14] sm:$0xf] %vm983, %v1011
          %1030 = vst.msk [vmem:[#allocation3 + $0x18] sm:$0xf] %vm983, %v1013
          %1031 = vst.msk [vmem:[#allocation3 + $0x1c] sm:$0xf] %vm983, %v1015
          %v1032 = vld [vmem:[%s843] sm:$0xff]
          %v1033 = vpack.c.bf16 %v1032, %v1032
          %v1034 = vld [vmem:[#allocation14] sm:$0xf]
          %v1035 = vld [vmem:[#allocation14 + $0x4] sm:$0xf]
          %v1036 = vld [vmem:[#allocation14 + $0x8] sm:$0xf]
          %v1037 = vld [vmem:[#allocation14 + $0xc] sm:$0xf]
          %v1038 = vld [vmem:[%s15] sm:$0x1]
          %v1040 = vperm.slane %v1038, 0
          %v1046 = vunpack.c.l.b16 %v1034
          %v1047 = vunpack.c.l.b16 %v1035
          %v1048 = vunpack.c.l.b16 %v1036
          %v1049 = vunpack.c.l.b16 %v1037
          %v1050 = vpack.c.b16 %v1047, %v1046
          %v1051 = vpack.c.b16 %v1049, %v1048
          %v1055 = vsel %vm859, %v1033, 0
          %1057 = vmatpush.bf16.msra.mxu0 0
          %1058 = vmatpush.bf16.msra.mxu0 0
          %1059 = vmatpush.bf16.msra.mxu0 0
          %1060 = vmatpush.bf16.msra.mxu0 0
          %1061 = vmatpush.bf16.msra.mxu0 0
          %1062 = vmatpush.bf16.msra.mxu0 0
          %1063 = vmatpush.bf16.msra.mxu0 %v1051
          %1064 = vmatpush.bf16.msra.mxu0 %v1050
          %1065 = vmatmul.bf16.gmra.mxu0 %v1055
          %v1066 = vpop.f32.mrf.mxu0
          %v1067 = vadd.f32 %v1040, %v1066
          %v1068 = vpop.f32.mrf.mxu0
          %1069 = vdwg.mxu0
          %1071 = vrot.lane.b32.xlu0 %v1067, 120
          %v1072 = vpop.permute.xlu0 %1071
          %1074 = vrot.lane.b32.xlu0 %v1067, 112
          %v1075 = vpop.permute.xlu0 %1074
          %1077 = vrot.lane.b32.xlu0 %v1067, 104
          %v1078 = vpop.permute.xlu0 %1077
          %v1080 = vpack.c.bf16 %v1067, %v1067
          %v1081 = vpack.c.bf16 %v1072, %v1072
          %v1082 = vpack.c.bf16 %v1075, %v1075
          %v1083 = vpack.c.bf16 %v1078, %v1078
          %1084 = vst.msk [vmem:[#allocation4] sm:$0xf] %vm983, %v1080
          %1085 = vst.msk [vmem:[#allocation4 + $0x4] sm:$0xf] %vm983, %v1081
          %1086 = vst.msk [vmem:[#allocation4 + $0x8] sm:$0xf] %vm983, %v1082
          %1087 = vst.msk [vmem:[#allocation4 + $0xc] sm:$0xf] %vm983, %v1083
          %1092 = vrot.lane.b32.xlu0 %v1080, 96
          %v1093 = vpop.permute.xlu0 %1092
          %1094 = vrot.lane.b32.xlu0 %v1081, 96
          %v1095 = vpop.permute.xlu0 %1094
          %1096 = vrot.lane.b32.xlu0 %v1082, 96
          %v1097 = vpop.permute.xlu0 %1096
          %1098 = vrot.lane.b32.xlu0 %v1083, 96
          %v1099 = vpop.permute.xlu0 %1098
          %1104 = vst.msk [vmem:[#allocation5] sm:$0xf] %vm983, %v1093
          %1105 = vst.msk [vmem:[#allocation5 + $0x4] sm:$0xf] %vm983, %v1095
          %1106 = vst.msk [vmem:[#allocation5 + $0x8] sm:$0xf] %vm983, %v1097
          %1107 = vst.msk [vmem:[#allocation5 + $0xc] sm:$0xf] %vm983, %v1099
        $region136: #{tpu_custom_call.1} parent=103 // pred_fallthru
          _
        %v1108 = vld [vmem:[%s834] sm:$0xff]
        %vm1109 = vcmask 261120
        %v1110 = vsel %vm1109, %v1108, 0.0
        %1111 = vadd.xlane.f32.xlu0 %v1110
        %v1112 = vpop.xlane.xlu0 %1111
        %v1113 = vrcp.pop 32.0
        %v1114 = vmul.f32 32.0, %v1113
        %v1115 = vsub.f32 1.0, %v1114
        %v1116 = vmul.f32 %v1113, %v1115
        %v1117 = vadd.f32 %v1113, %v1116
        %vm1118 = vweird.f32 %v1113
        %v1119 = vsel %vm1118, %v1113, %v1117
        %v1120 = vmul.f32 %v1112, %v1119
        %v1121 = vsub.f32 %v1108, %v1120
        %v1122 = vmul.f32 %v1121, %v1121
        %v1123 = vsel %vm1109, %v1122, 0.0
        %1124 = vadd.xlane.f32.xlu0 %v1123
        %v1125 = vpop.xlane.xlu0 %1124
        %v1126 = vmul.f32 %v1125, %v1119
        %v1127 = vadd.f32 %v1126, 1e-06
        %v1128 = vrsqrt.pop %v1127
        %v1129 = vmul.f32 %v1128, %v1127
        %v1130 = vmul.f32 %v1129, %v1128
        %v1131 = vmul.f32 0.5, %v1130
        %v1132 = vsub.f32 1.5, %v1131
        %v1133 = vmul.f32 %v1128, %v1132
        %vm1134 = vweird.f32 %v1127
        %vm1135 = vweird.f32 %v1128
        %vm1136 = vmor %vm1134, %vm1135
        %v1137 = vsel %vm1136, %v1128, %v1133
        %v1138 = vmul.f32 %v1121, %v1137
        %v1139 = vperm.slane %v852, 1
        %v1140 = vmul.f32 %v1138, %v1139
        %v1141 = vperm.slane %v851, 0
        %v1142 = vadd.f32 %v1140, %v1141
        %v1143 = vpack.c.bf16 %v1142, %v1142
        %v1144 = vld [vmem:[#allocation9] sm:$0xf]
        %v1145 = vld [vmem:[#allocation9 + $0x4] sm:$0xf]
        %v1146 = vld [vmem:[#allocation9 + $0x8] sm:$0xf]
        %v1147 = vld [vmem:[#allocation9 + $0xc] sm:$0xf]
        %v1148 = vld [vmem:[%s8] sm:$0x1]
        %v1150 = vperm.slane %v1148, 0
        %v1156 = vunpack.c.l.b16 %v1144
        %v1157 = vunpack.c.l.b16 %v1145
        %v1158 = vunpack.c.l.b16 %v1146
        %v1159 = vunpack.c.l.b16 %v1147
        %v1160 = vpack.c.b16 %v1157, %v1156
        %v1161 = vpack.c.b16 %v1159, %v1158
        %v1165 = vsel %vm1109, %v1143, 0
        %1167 = vmatpush.bf16.msra.mxu0 0
        %1168 = vmatpush.bf16.msra.mxu0 0
        %1169 = vmatpush.bf16.msra.mxu0 0
        %1170 = vmatpush.bf16.msra.mxu0 0
        %1171 = vmatpush.bf16.msra.mxu0 0
        %1172 = vmatpush.bf16.msra.mxu0 0
        %1173 = vmatpush.bf16.msra.mxu0 %v1161
        %1174 = vmatpush.bf16.msra.mxu0 %v1160
        %1175 = vmatmul.bf16.gmra.mxu0 %v1165
        %v1176 = vpop.f32.mrf.mxu0
        %v1177 = vadd.f32 %v1150, %v1176
        %v1178 = vpop.f32.mrf.mxu0
        %1179 = vdwg.mxu0
        %1181 = vrot.lane.b32.xlu0 %v1177, 120
        %v1182 = vpop.permute.xlu0 %1181
        %1184 = vrot.lane.b32.xlu0 %v1177, 112
        %v1185 = vpop.permute.xlu0 %1184
        %1187 = vrot.lane.b32.xlu0 %v1177, 104
        %v1188 = vpop.permute.xlu0 %1187
        %v1190 = vpack.c.bf16 %v1177, %v1177
        %v1191 = vpack.c.bf16 %v1182, %v1182
        %v1192 = vpack.c.bf16 %v1185, %v1185
        %v1193 = vpack.c.bf16 %v1188, %v1188
        %v1194 = vld [vmem:[#allocation2] sm:$0xf]
        %v1195 = vld [vmem:[#allocation2 + $0x4] sm:$0xf]
        %v1196 = vld [vmem:[#allocation2 + $0x8] sm:$0xf]
        %v1197 = vld [vmem:[#allocation2 + $0xc] sm:$0xf]
        %v1198 = vld [vmem:[#allocation2 + $0x10] sm:$0xf]
        %v1199 = vld [vmem:[#allocation2 + $0x14] sm:$0xf]
        %v1200 = vld [vmem:[#allocation2 + $0x18] sm:$0xf]
        %v1201 = vld [vmem:[#allocation2 + $0x1c] sm:$0xf]
        %v1202 = vld [vmem:[#allocation3] sm:$0xf]
        %v1203 = vld [vmem:[#allocation3 + $0x4] sm:$0xf]
        %v1204 = vld [vmem:[#allocation3 + $0x8] sm:$0xf]
        %v1205 = vld [vmem:[#allocation3 + $0xc] sm:$0xf]
        %v1206 = vld [vmem:[#allocation3 + $0x10] sm:$0xf]
        %v1207 = vld [vmem:[#allocation3 + $0x14] sm:$0xf]
        %v1208 = vld [vmem:[#allocation3 + $0x18] sm:$0xf]
        %v1209 = vld [vmem:[#allocation3 + $0x1c] sm:$0xf]
        %v1212 = vunpack.c.l.b16 %v1194
        %v1213 = vunpack.c.l.b16 %v1195
        %v1214 = vpack.c.b16 %v1213, %v1212
        %vm1215 = vcmask 64512
        %v1217 = vsel %vm1215, %v1190, 0
        %v1220 = vsel %vm1215, %v1214, 0
        %1222 = vmatpush.bf16.xpose.msra.mxu0 0
        %1223 = vmatpush.bf16.xpose.msra.mxu0 0
        %1224 = vmatpush.bf16.xpose.msra.mxu0 0
        %1225 = vmatpush.bf16.xpose.msra.mxu0 0
        %1226 = vmatpush.bf16.xpose.msra.mxu0 0
        %1227 = vmatpush.bf16.xpose.msra.mxu0 0
        %1228 = vmatpush.bf16.xpose.msra.mxu0 0
        %1229 = vmatpush.bf16.xpose.msra.mxu0 %v1220
        %1230 = vmatmul.bf16.gmra.mxu0 %v1217
        %v1231 = vpop.f32.mrf.mxu0
        %v1232 = vadd.f32 0.0, %v1231
        %v1233 = vpop.f32.mrf.mxu0
        %1234 = vdwg.mxu0
        %v1237 = vunpack.c.l.b16 %v1196
        %v1238 = vunpack.c.l.b16 %v1197
        %v1239 = vpack.c.b16 %v1238, %v1237
        %v1241 = vsel %vm1215, %v1191, 0
        %v1244 = vsel %vm1215, %v1239, 0
        %1246 = vmatpush.bf16.xpose.msra.mxu0 0
        %1247 = vmatpush.bf16.xpose.msra.mxu0 0
        %1248 = vmatpush.bf16.xpose.msra.mxu0 0
        %1249 = vmatpush.bf16.xpose.msra.mxu0 0
        %1250 = vmatpush.bf16.xpose.msra.mxu0 0
        %1251 = vmatpush.bf16.xpose.msra.mxu0 0
        %1252 = vmatpush.bf16.xpose.msra.mxu0 0
        %1253 = vmatpush.bf16.xpose.msra.mxu0 %v1244
        %1254 = vmatmul.bf16.gmra.mxu0 %v1241
        %v1255 = vpop.f32.mrf.mxu0
        %v1256 = vadd.f32 0.0, %v1255
        %v1257 = vpop.f32.mrf.mxu0
        %1258 = vdwg.mxu0
        %v1261 = vunpack.c.l.b16 %v1198
        %v1262 = vunpack.c.l.b16 %v1199
        %v1263 = vpack.c.b16 %v1262, %v1261
        %v1265 = vsel %vm1215, %v1192, 0
        %v1268 = vsel %vm1215, %v1263, 0
        %1270 = vmatpush.bf16.xpose.msra.mxu0 0
        %1271 = vmatpush.bf16.xpose.msra.mxu0 0
        %1272 = vmatpush.bf16.xpose.msra.mxu0 0
        %1273 = vmatpush.bf16.xpose.msra.mxu0 0
        %1274 = vmatpush.bf16.xpose.msra.mxu0 0
        %1275 = vmatpush.bf16.xpose.msra.mxu0 0
        %1276 = vmatpush.bf16.xpose.msra.mxu0 0
        %1277 = vmatpush.bf16.xpose.msra.mxu0 %v1268
        %1278 = vmatmul.bf16.gmra.mxu0 %v1265
        %v1279 = vpop.f32.mrf.mxu0
        %v1280 = vadd.f32 0.0, %v1279
        %v1281 = vpop.f32.mrf.mxu0
        %1282 = vdwg.mxu0
        %v1285 = vunpack.c.l.b16 %v1200
        %v1286 = vunpack.c.l.b16 %v1201
        %v1287 = vpack.c.b16 %v1286, %v1285
        %v1289 = vsel %vm1215, %v1193, 0
        %v1292 = vsel %vm1215, %v1287, 0
        %1294 = vmatpush.bf16.xpose.msra.mxu0 0
        %1295 = vmatpush.bf16.xpose.msra.mxu0 0
        %1296 = vmatpush.bf16.xpose.msra.mxu0 0
        %1297 = vmatpush.bf16.xpose.msra.mxu0 0
        %1298 = vmatpush.bf16.xpose.msra.mxu0 0
        %1299 = vmatpush.bf16.xpose.msra.mxu0 0
        %1300 = vmatpush.bf16.xpose.msra.mxu0 0
        %1301 = vmatpush.bf16.xpose.msra.mxu0 %v1292
        %1302 = vmatmul.bf16.gmra.mxu0 %v1289
        %v1303 = vpop.f32.mrf.mxu0
        %v1304 = vadd.f32 0.0, %v1303
        %v1305 = vpop.f32.mrf.mxu0
        %1306 = vdwg.mxu0
        %v1307 = vmul.f32 %v1232, 0.35355338
        %v1308 = vmul.f32 %v1256, 0.35355338
        %v1309 = vmul.f32 %v1280, 0.35355338
        %v1310 = vmul.f32 %v1304, 0.35355338
        %vm1311 = vcmask 130048
        %v1312 = vsel %vm1311, %v1307, -inf
        %1313 = vmax.xlane.f32.xlu0 %v1312
        %v1314 = vpop.xlane.xlu0 %1313
        %v1315 = vsel %vm1311, %v1308, -inf
        %1316 = vmax.xlane.f32.xlu0 %v1315
        %v1317 = vpop.xlane.xlu0 %1316
        %v1318 = vsel %vm1311, %v1309, -inf
        %1319 = vmax.xlane.f32.xlu0 %v1318
        %v1320 = vpop.xlane.xlu0 %1319
        %v1321 = vsel %vm1311, %v1310, -inf
        %1322 = vmax.xlane.f32.xlu0 %v1321
        %v1323 = vpop.xlane.xlu0 %1322
        %v1324 = vsub.f32 %v1307, %v1314
        %v1325 = vsub.f32 %v1308, %v1317
        %v1326 = vsub.f32 %v1309, %v1320
        %v1327 = vsub.f32 %v1310, %v1323
        %v1328 = vmul.f32 %v1324, 1.442695
        %v1329 = vpow.pop %v1328
        %v1330 = vmul.f32 %v1325, 1.442695
        %v1331 = vpow.pop %v1330
        %v1332 = vmul.f32 %v1326, 1.442695
        %v1333 = vpow.pop %v1332
        %v1334 = vmul.f32 %v1327, 1.442695
        %v1335 = vpow.pop %v1334
        %v1336 = vsel %vm1311, %v1329, 0.0
        %1337 = vadd.xlane.f32.xlu0 %v1336
        %v1338 = vpop.xlane.xlu0 %1337
        %v1339 = vsel %vm1311, %v1331, 0.0
        %1340 = vadd.xlane.f32.xlu0 %v1339
        %v1341 = vpop.xlane.xlu0 %1340
        %v1342 = vsel %vm1311, %v1333, 0.0
        %1343 = vadd.xlane.f32.xlu0 %v1342
        %v1344 = vpop.xlane.xlu0 %1343
        %v1345 = vsel %vm1311, %v1335, 0.0
        %1346 = vadd.xlane.f32.xlu0 %v1345
        %v1347 = vpop.xlane.xlu0 %1346
        %v1348 = vrcp.pop %v1338
        %v1349 = vrcp.pop %v1341
        %v1350 = vrcp.pop %v1344
        %v1351 = vrcp.pop %v1347
        %v1352 = vmul.f32 %v1329, %v1348
        %v1353 = vmul.f32 %v1331, %v1349
        %v1354 = vmul.f32 %v1333, %v1350
        %v1355 = vmul.f32 %v1335, %v1351
        %v1356 = vpack.c.bf16 %v1352, %v1352
        %v1357 = vpack.c.bf16 %v1353, %v1353
        %v1358 = vpack.c.bf16 %v1354, %v1354
        %v1359 = vpack.c.bf16 %v1355, %v1355
        %v1362 = vunpack.c.l.b16 %v1202
        %v1363 = vunpack.c.l.b16 %v1203
        %v1364 = vpack.c.b16 %v1363, %v1362
        %v1367 = vsel %vm1311, %v1356, 0
        %1369 = vmatpush.bf16.msra.mxu0 0
        %1370 = vmatpush.bf16.msra.mxu0 0
        %1371 = vmatpush.bf16.msra.mxu0 0
        %1372 = vmatpush.bf16.msra.mxu0 0
        %1373 = vmatpush.bf16.msra.mxu0 0
        %1374 = vmatpush.bf16.msra.mxu0 0
        %1375 = vmatpush.bf16.msra.mxu0 0
        %1376 = vmatpush.bf16.msra.mxu0 %v1364
        %1377 = vmatmul.bf16.gmra.mxu0 %v1367
        %v1378 = vpop.f32.mrf.mxu0
        %v1379 = vadd.f32 0.0, %v1378
        %v1380 = vpop.f32.mrf.mxu0
        %1381 = vdwg.mxu0
        %v1384 = vunpack.c.l.b16 %v1204
        %v1385 = vunpack.c.l.b16 %v1205
        %v1386 = vpack.c.b16 %v1385, %v1384
        %v1389 = vsel %vm1311, %v1357, 0
        %1391 = vmatpush.bf16.msra.mxu0 0
        %1392 = vmatpush.bf16.msra.mxu0 0
        %1393 = vmatpush.bf16.msra.mxu0 0
        %1394 = vmatpush.bf16.msra.mxu0 0
        %1395 = vmatpush.bf16.msra.mxu0 0
        %1396 = vmatpush.bf16.msra.mxu0 0
        %1397 = vmatpush.bf16.msra.mxu0 0
        %1398 = vmatpush.bf16.msra.mxu0 %v1386
        %1399 = vmatmul.bf16.gmra.mxu0 %v1389
        %v1400 = vpop.f32.mrf.mxu0
        %v1401 = vadd.f32 0.0, %v1400
        %v1402 = vpop.f32.mrf.mxu0
        %1403 = vdwg.mxu0
        %v1406 = vunpack.c.l.b16 %v1206
        %v1407 = vunpack.c.l.b16 %v1207
        %v1408 = vpack.c.b16 %v1407, %v1406
        %v1411 = vsel %vm1311, %v1358, 0
        %1413 = vmatpush.bf16.msra.mxu0 0
        %1414 = vmatpush.bf16.msra.mxu0 0
        %1415 = vmatpush.bf16.msra.mxu0 0
        %1416 = vmatpush.bf16.msra.mxu0 0
        %1417 = vmatpush.bf16.msra.mxu0 0
        %1418 = vmatpush.bf16.msra.mxu0 0
        %1419 = vmatpush.bf16.msra.mxu0 0
        %1420 = vmatpush.bf16.msra.mxu0 %v1408
        %1421 = vmatmul.bf16.gmra.mxu0 %v1411
        %v1422 = vpop.f32.mrf.mxu0
        %v1423 = vadd.f32 0.0, %v1422
        %v1424 = vpop.f32.mrf.mxu0
        %1425 = vdwg.mxu0
        %v1428 = vunpack.c.l.b16 %v1208
        %v1429 = vunpack.c.l.b16 %v1209
        %v1430 = vpack.c.b16 %v1429, %v1428
        %v1433 = vsel %vm1311, %v1359, 0
        %1435 = vmatpush.bf16.msra.mxu0 0
        %1436 = vmatpush.bf16.msra.mxu0 0
        %1437 = vmatpush.bf16.msra.mxu0 0
        %1438 = vmatpush.bf16.msra.mxu0 0
        %1439 = vmatpush.bf16.msra.mxu0 0
        %1440 = vmatpush.bf16.msra.mxu0 0
        %1441 = vmatpush.bf16.msra.mxu0 0
        %1442 = vmatpush.bf16.msra.mxu0 %v1430
        %1443 = vmatmul.bf16.gmra.mxu0 %v1433
        %v1444 = vpop.f32.mrf.mxu0
        %v1445 = vadd.f32 0.0, %v1444
        %v1446 = vpop.f32.mrf.mxu0
        %1447 = vdwg.mxu0
        %1449 = vrot.lane.b32.xlu0 %v1401, 8
        %v1450 = vpop.permute.xlu0 %1449
        %1453 = vrot.lane.b32.xlu0 %v1423, 16
        %v1454 = vpop.permute.xlu0 %1453
        %1457 = vrot.lane.b32.xlu0 %v1445, 24
        %v1458 = vpop.permute.xlu0 %1457
        %v1460 = vsel %vm1215, %v1379, %v1450
        %v1461 = vsel %vm1311, %v1460, %v1454
        %vm1462 = vcmask 195584
        %v1463 = vsel %vm1462, %v1461, %v1458
        %v1464 = vpack.c.bf16 %v1463, %v1463
        %v1465 = vld [vmem:[#allocation11] sm:$0xf]
        %v1466 = vld [vmem:[#allocation11 + $0x4] sm:$0xf]
        %v1467 = vld [vmem:[#allocation11 + $0x8] sm:$0xf]
        %v1468 = vld [vmem:[#allocation11 + $0xc] sm:$0xf]
        %v1469 = vld [vmem:[%s10] sm:$0x1]
        %v1471 = vperm.slane %v1469, 0
        %v1477 = vunpack.c.l.b16 %v1465
        %v1478 = vunpack.c.l.b16 %v1466
        %v1479 = vunpack.c.l.b16 %v1467
        %v1480 = vunpack.c.l.b16 %v1468
        %v1481 = vpack.c.b16 %v1478, %v1477
        %v1482 = vpack.c.b16 %v1480, %v1479
        %v1486 = vsel %vm1109, %v1464, 0
        %1488 = vmatpush.bf16.msra.mxu0 0
        %1489 = vmatpush.bf16.msra.mxu0 0
        %1490 = vmatpush.bf16.msra.mxu0 0
        %1491 = vmatpush.bf16.msra.mxu0 0
        %1492 = vmatpush.bf16.msra.mxu0 0
        %1493 = vmatpush.bf16.msra.mxu0 0
        %1494 = vmatpush.bf16.msra.mxu0 %v1482
        %1495 = vmatpush.bf16.msra.mxu0 %v1481
        %1496 = vmatmul.bf16.gmra.mxu0 %v1486
        %v1497 = vpop.f32.mrf.mxu0
        %v1498 = vadd.f32 %v1471, %v1497
        %v1499 = vpop.f32.mrf.mxu0
        %1500 = vdwg.mxu0
        %v1501 = vperm.slane %v851, 2
        %v1502 = vmul.f32 %v1501, %v1498
        %v1503 = vadd.f32 %v1108, %v1502
        %v1504 = vpack.c.bf16 %v1503, %v1503
        %v1505 = vld [vmem:[#allocation12] sm:$0xf]
        %v1506 = vld [vmem:[#allocation12 + $0x4] sm:$0xf]
        %v1507 = vld [vmem:[#allocation12 + $0x8] sm:$0xf]
        %v1508 = vld [vmem:[#allocation12 + $0xc] sm:$0xf]
        %v1509 = vld [vmem:[%s14] sm:$0x1]
        %v1511 = vperm.slane %v1509, 0
        %v1517 = vunpack.c.l.b16 %v1505
        %v1518 = vunpack.c.l.b16 %v1506
        %v1519 = vunpack.c.l.b16 %v1507
        %v1520 = vunpack.c.l.b16 %v1508
        %v1521 = vpack.c.b16 %v1518, %v1517
        %v1522 = vpack.c.b16 %v1520, %v1519
        %v1526 = vsel %vm1109, %v1504, 0
        %1528 = vmatpush.bf16.msra.mxu0 0
        %1529 = vmatpush.bf16.msra.mxu0 0
        %1530 = vmatpush.bf16.msra.mxu0 0
        %1531 = vmatpush.bf16.msra.mxu0 0
        %1532 = vmatpush.bf16.msra.mxu0 0
        %1533 = vmatpush.bf16.msra.mxu0 0
        %1534 = vmatpush.bf16.msra.mxu0 %v1522
        %1535 = vmatpush.bf16.msra.mxu0 %v1521
        %1536 = vmatmul.bf16.gmra.mxu0 %v1526
        %v1537 = vpop.f32.mrf.mxu0
        %v1538 = vadd.f32 %v1511, %v1537
        %v1539 = vpop.f32.mrf.mxu0
        %1540 = vdwg.mxu0
        %1542 = vrot.lane.b32.xlu0 %v1538, 120
        %v1543 = vpop.permute.xlu0 %1542
        %1545 = vrot.lane.b32.xlu0 %v1538, 112
        %v1546 = vpop.permute.xlu0 %1545
        %1548 = vrot.lane.b32.xlu0 %v1538, 104
        %v1549 = vpop.permute.xlu0 %1548
        %v1551 = vpack.c.bf16 %v1538, %v1538
        %v1552 = vpack.c.bf16 %v1543, %v1543
        %v1553 = vpack.c.bf16 %v1546, %v1546
        %v1554 = vpack.c.bf16 %v1549, %v1549
        %v1555 = vld [vmem:[#allocation4] sm:$0xf]
        %v1556 = vld [vmem:[#allocation4 + $0x4] sm:$0xf]
        %v1557 = vld [vmem:[#allocation4 + $0x8] sm:$0xf]
        %v1558 = vld [vmem:[#allocation4 + $0xc] sm:$0xf]
        %v1559 = vld [vmem:[#allocation5] sm:$0xf]
        %v1560 = vld [vmem:[#allocation5 + $0x4] sm:$0xf]
        %v1561 = vld [vmem:[#allocation5 + $0x8] sm:$0xf]
        %v1562 = vld [vmem:[#allocation5 + $0xc] sm:$0xf]
        %v1564 = vsel %vm1215, %v1551, 0
        %v1567 = vsel %vm1215, %v1555, 0
        %1569 = vmatpush.bf16.xpose.msra.mxu0 0
        %1570 = vmatpush.bf16.xpose.msra.mxu0 0
        %1571 = vmatpush.bf16.xpose.msra.mxu0 0
        %1572 = vmatpush.bf16.xpose.msra.mxu0 0
        %1573 = vmatpush.bf16.xpose.msra.mxu0 0
        %1574 = vmatpush.bf16.xpose.msra.mxu0 0
        %1575 = vmatpush.bf16.xpose.msra.mxu0 0
        %1576 = vmatpush.bf16.xpose.msra.mxu0 %v1567
        %1577 = vmatmul.bf16.gmra.mxu0 %v1564
        %v1578 = vpop.f32.mrf.mxu0
        %v1579 = vadd.f32 0.0, %v1578
        %v1580 = vpop.f32.mrf.mxu0
        %1581 = vdwg.mxu0
        %v1583 = vsel %vm1215, %v1552, 0
        %v1586 = vsel %vm1215, %v1556, 0
        %1588 = vmatpush.bf16.xpose.msra.mxu0 0
        %1589 = vmatpush.bf16.xpose.msra.mxu0 0
        %1590 = vmatpush.bf16.xpose.msra.mxu0 0
        %1591 = vmatpush.bf16.xpose.msra.mxu0 0
        %1592 = vmatpush.bf16.xpose.msra.mxu0 0
        %1593 = vmatpush.bf16.xpose.msra.mxu0 0
        %1594 = vmatpush.bf16.xpose.msra.mxu0 0
        %1595 = vmatpush.bf16.xpose.msra.mxu0 %v1586
        %1596 = vmatmul.bf16.gmra.mxu0 %v1583
        %v1597 = vpop.f32.mrf.mxu0
        %v1598 = vadd.f32 0.0, %v1597
        %v1599 = vpop.f32.mrf.mxu0
        %1600 = vdwg.mxu0
        %v1602 = vsel %vm1215, %v1553, 0
        %v1605 = vsel %vm1215, %v1557, 0
        %1607 = vmatpush.bf16.xpose.msra.mxu0 0
        %1608 = vmatpush.bf16.xpose.msra.mxu0 0
        %1609 = vmatpush.bf16.xpose.msra.mxu0 0
        %1610 = vmatpush.bf16.xpose.msra.mxu0 0
        %1611 = vmatpush.bf16.xpose.msra.mxu0 0
        %1612 = vmatpush.bf16.xpose.msra.mxu0 0
        %1613 = vmatpush.bf16.xpose.msra.mxu0 0
        %1614 = vmatpush.bf16.xpose.msra.mxu0 %v1605
        %1615 = vmatmul.bf16.gmra.mxu0 %v1602
        %v1616 = vpop.f32.mrf.mxu0
        %v1617 = vadd.f32 0.0, %v1616
        %v1618 = vpop.f32.mrf.mxu0
        %1619 = vdwg.mxu0
        %v1621 = vsel %vm1215, %v1554, 0
        %v1624 = vsel %vm1215, %v1558, 0
        %1626 = vmatpush.bf16.xpose.msra.mxu0 0
        %1627 = vmatpush.bf16.xpose.msra.mxu0 0
        %1628 = vmatpush.bf16.xpose.msra.mxu0 0
        %1629 = vmatpush.bf16.xpose.msra.mxu0 0
        %1630 = vmatpush.bf16.xpose.msra.mxu0 0
        %1631 = vmatpush.bf16.xpose.msra.mxu0 0
        %1632 = vmatpush.bf16.xpose.msra.mxu0 0
        %1633 = vmatpush.bf16.xpose.msra.mxu0 %v1624
        %1634 = vmatmul.bf16.gmra.mxu0 %v1621
        %v1635 = vpop.f32.mrf.mxu0
        %v1636 = vadd.f32 0.0, %v1635
        %v1637 = vpop.f32.mrf.mxu0
        %1638 = vdwg.mxu0
        %v1639 = vmul.f32 %v1579, 0.35355338
        %v1640 = vmul.f32 %v1598, 0.35355338
        %v1641 = vmul.f32 %v1617, 0.35355338
        %v1642 = vmul.f32 %v1636, 0.35355338
        %v1643 = vsel %vm1215, %v1639, -inf
        %1644 = vmax.xlane.f32.xlu0 %v1643
        %v1645 = vpop.xlane.xlu0 %1644
        %v1646 = vsel %vm1215, %v1640, -inf
        %1647 = vmax.xlane.f32.xlu0 %v1646
        %v1648 = vpop.xlane.xlu0 %1647
        %v1649 = vsel %vm1215, %v1641, -inf
        %1650 = vmax.xlane.f32.xlu0 %v1649
        %v1651 = vpop.xlane.xlu0 %1650
        %v1652 = vsel %vm1215, %v1642, -inf
        %1653 = vmax.xlane.f32.xlu0 %v1652
        %v1654 = vpop.xlane.xlu0 %1653
        %v1655 = vsub.f32 %v1639, %v1645
        %v1656 = vsub.f32 %v1640, %v1648
        %v1657 = vsub.f32 %v1641, %v1651
        %v1658 = vsub.f32 %v1642, %v1654
        %v1659 = vmul.f32 %v1655, 1.442695
        %v1660 = vpow.pop %v1659
        %v1661 = vmul.f32 %v1656, 1.442695
        %v1662 = vpow.pop %v1661
        %v1663 = vmul.f32 %v1657, 1.442695
        %v1664 = vpow.pop %v1663
        %v1665 = vmul.f32 %v1658, 1.442695
        %v1666 = vpow.pop %v1665
        %v1667 = vsel %vm1215, %v1660, 0.0
        %1668 = vadd.xlane.f32.xlu0 %v1667
        %v1669 = vpop.xlane.xlu0 %1668
        %v1670 = vsel %vm1215, %v1662, 0.0
        %1671 = vadd.xlane.f32.xlu0 %v1670
        %v1672 = vpop.xlane.xlu0 %1671
        %v1673 = vsel %vm1215, %v1664, 0.0
        %1674 = vadd.xlane.f32.xlu0 %v1673
        %v1675 = vpop.xlane.xlu0 %1674
        %v1676 = vsel %vm1215, %v1666, 0.0
        %1677 = vadd.xlane.f32.xlu0 %v1676
        %v1678 = vpop.xlane.xlu0 %1677
        %v1679 = vrcp.pop %v1669
        %v1680 = vrcp.pop %v1672
        %v1681 = vrcp.pop %v1675
        %v1682 = vrcp.pop %v1678
        %v1683 = vmul.f32 %v1660, %v1679
        %v1684 = vmul.f32 %v1662, %v1680
        %v1685 = vmul.f32 %v1664, %v1681
        %v1686 = vmul.f32 %v1666, %v1682
        %v1687 = vpack.c.bf16 %v1683, %v1683
        %v1688 = vpack.c.bf16 %v1684, %v1684
        %v1689 = vpack.c.bf16 %v1685, %v1685
        %v1690 = vpack.c.bf16 %v1686, %v1686
        %v1692 = vsel %vm1215, %v1687, 0
        %vm1694 = vcmask 1043456
        %v1696 = vsel %vm1694, %v1559, 0
        %1698 = vmatpush.bf16.msra.mxu0 0
        %1699 = vmatpush.bf16.msra.mxu0 0
        %1700 = vmatpush.bf16.msra.mxu0 0
        %1701 = vmatpush.bf16.msra.mxu0 0
        %1702 = vmatpush.bf16.msra.mxu0 0
        %1703 = vmatpush.bf16.msra.mxu0 0
        %1704 = vmatpush.bf16.msra.mxu0 0
        %1705 = vmatpush.bf16.msra.mxu0 %v1696
        %1706 = vmatmul.bf16.gmra.mxu0 %v1692
        %v1707 = vpop.f32.mrf.mxu0
        %v1708 = vadd.f32 0.0, %v1707
        %v1709 = vpop.f32.mrf.mxu0
        %1710 = vdwg.mxu0
        %v1712 = vsel %vm1215, %v1688, 0
        %v1715 = vsel %vm1694, %v1560, 0
        %1717 = vmatpush.bf16.msra.mxu0 0
        %1718 = vmatpush.bf16.msra.mxu0 0
        %1719 = vmatpush.bf16.msra.mxu0 0
        %1720 = vmatpush.bf16.msra.mxu0 0
        %1721 = vmatpush.bf16.msra.mxu0 0
        %1722 = vmatpush.bf16.msra.mxu0 0
        %1723 = vmatpush.bf16.msra.mxu0 0
        %1724 = vmatpush.bf16.msra.mxu0 %v1715
        %1725 = vmatmul.bf16.gmra.mxu0 %v1712
        %v1726 = vpop.f32.mrf.mxu0
        %v1727 = vadd.f32 0.0, %v1726
        %v1728 = vpop.f32.mrf.mxu0
        %1729 = vdwg.mxu0
        %v1731 = vsel %vm1215, %v1689, 0
        %v1734 = vsel %vm1694, %v1561, 0
        %1736 = vmatpush.bf16.msra.mxu0 0
        %1737 = vmatpush.bf16.msra.mxu0 0
        %1738 = vmatpush.bf16.msra.mxu0 0
        %1739 = vmatpush.bf16.msra.mxu0 0
        %1740 = vmatpush.bf16.msra.mxu0 0
        %1741 = vmatpush.bf16.msra.mxu0 0
        %1742 = vmatpush.bf16.msra.mxu0 0
        %1743 = vmatpush.bf16.msra.mxu0 %v1734
        %1744 = vmatmul.bf16.gmra.mxu0 %v1731
        %v1745 = vpop.f32.mrf.mxu0
        %v1746 = vadd.f32 0.0, %v1745
        %v1747 = vpop.f32.mrf.mxu0
        %1748 = vdwg.mxu0
        %v1750 = vsel %vm1215, %v1690, 0
        %v1753 = vsel %vm1694, %v1562, 0
        %1755 = vmatpush.bf16.msra.mxu0 0
        %1756 = vmatpush.bf16.msra.mxu0 0
        %1757 = vmatpush.bf16.msra.mxu0 0
        %1758 = vmatpush.bf16.msra.mxu0 0
        %1759 = vmatpush.bf16.msra.mxu0 0
        %1760 = vmatpush.bf16.msra.mxu0 0
        %1761 = vmatpush.bf16.msra.mxu0 0
        %1762 = vmatpush.bf16.msra.mxu0 %v1753
        %1763 = vmatmul.bf16.gmra.mxu0 %v1750
        %v1764 = vpop.f32.mrf.mxu0
        %v1765 = vadd.f32 0.0, %v1764
        %v1766 = vpop.f32.mrf.mxu0
        %1767 = vdwg.mxu0
        %1769 = vrot.lane.b32.xlu0 %v1727, 8
        %v1770 = vpop.permute.xlu0 %1769
        %1773 = vrot.lane.b32.xlu0 %v1746, 16
        %v1774 = vpop.permute.xlu0 %1773
        %1777 = vrot.lane.b32.xlu0 %v1765, 24
        %v1778 = vpop.permute.xlu0 %1777
        %v1780 = vsel %vm1215, %v1708, %v1770
        %v1781 = vsel %vm1311, %v1780, %v1774
        %v1782 = vsel %vm1462, %v1781, %v1778
        %v1783 = vpack.c.bf16 %v1782, %v1782
        %v1784 = vld [vmem:[#allocation15] sm:$0xf]
        %v1785 = vld [vmem:[#allocation15 + $0x4] sm:$0xf]
        %v1786 = vld [vmem:[#allocation15 + $0x8] sm:$0xf]
        %v1787 = vld [vmem:[#allocation15 + $0xc] sm:$0xf]
        %v1788 = vld [vmem:[%s16] sm:$0x1]
        %v1790 = vperm.slane %v1788, 0
        %v1796 = vunpack.c.l.b16 %v1784
        %v1797 = vunpack.c.l.b16 %v1785
        %v1798 = vunpack.c.l.b16 %v1786
        %v1799 = vunpack.c.l.b16 %v1787
        %v1800 = vpack.c.b16 %v1797, %v1796
        %v1801 = vpack.c.b16 %v1799, %v1798
        %v1805 = vsel %vm1109, %v1783, 0
        %1807 = vmatpush.bf16.msra.mxu0 0
        %1808 = vmatpush.bf16.msra.mxu0 0
        %1809 = vmatpush.bf16.msra.mxu0 0
        %1810 = vmatpush.bf16.msra.mxu0 0
        %1811 = vmatpush.bf16.msra.mxu0 0
        %1812 = vmatpush.bf16.msra.mxu0 0
        %1813 = vmatpush.bf16.msra.mxu0 %v1801
        %1814 = vmatpush.bf16.msra.mxu0 %v1800
        %1815 = vmatmul.bf16.gmra.mxu0 %v1805
        %v1816 = vpop.f32.mrf.mxu0
        %v1817 = vadd.f32 %v1790, %v1816
        %v1818 = vpop.f32.mrf.mxu0
        %1819 = vdwg.mxu0
        %v1820 = vadd.f32 %v1503, %v1817
        %v1821 = vsel %vm1109, %v1820, 0.0
        %1822 = vadd.xlane.f32.xlu0 %v1821
        %v1823 = vpop.xlane.xlu0 %1822
        %v1824 = vmul.f32 %v1823, %v1119
        %v1825 = vsub.f32 %v1820, %v1824
        %v1826 = vmul.f32 %v1825, %v1825
        %v1827 = vsel %vm1109, %v1826, 0.0
        %1828 = vadd.xlane.f32.xlu0 %v1827
        %v1829 = vpop.xlane.xlu0 %1828
        %v1830 = vmul.f32 %v1829, %v1119
        %v1831 = vadd.f32 %v1830, 1e-06
        %v1832 = vrsqrt.pop %v1831
        %v1833 = vmul.f32 %v1832, %v1831
        %v1834 = vmul.f32 %v1833, %v1832
        %v1835 = vmul.f32 0.5, %v1834
        %v1836 = vsub.f32 1.5, %v1835
        %v1837 = vmul.f32 %v1832, %v1836
        %vm1838 = vweird.f32 %v1831
        %vm1839 = vweird.f32 %v1832
        %vm1840 = vmor %vm1838, %vm1839
        %v1841 = vsel %vm1840, %v1832, %v1837
        %v1842 = vmul.f32 %v1825, %v1841
        %v1843 = vperm.slane %v852, 4
        %v1844 = vmul.f32 %v1842, %v1843
        %v1845 = vperm.slane %v851, 3
        %v1846 = vadd.f32 %v1844, %v1845
        %v1847 = vpack.c.bf16 %v1846, %v1846
        %v1848 = vld [vmem:[#allocation17] sm:$0xf]
        %v1849 = vld [vmem:[#allocation17 + $0x4] sm:$0xf]
        %v1850 = vld [vmem:[#allocation17 + $0x8] sm:$0xf]
        %v1851 = vld [vmem:[#allocation17 + $0xc] sm:$0xf]
        %v1852 = vld [vmem:[%s18] sm:$0x1]
        %v1854 = vperm.slane %v1852, 0
        %v1860 = vunpack.c.l.b16 %v1848
        %v1861 = vunpack.c.l.b16 %v1849
        %v1862 = vunpack.c.l.b16 %v1850
        %v1863 = vunpack.c.l.b16 %v1851
        %v1864 = vpack.c.b16 %v1861, %v1860
        %v1865 = vpack.c.b16 %v1863, %v1862
        %v1869 = vsel %vm1109, %v1847, 0
        %1871 = vmatpush.bf16.msra.mxu0 0
        %1872 = vmatpush.bf16.msra.mxu0 0
        %1873 = vmatpush.bf16.msra.mxu0 0
        %1874 = vmatpush.bf16.msra.mxu0 0
        %1875 = vmatpush.bf16.msra.mxu0 0
        %1876 = vmatpush.bf16.msra.mxu0 0
        %1877 = vmatpush.bf16.msra.mxu0 %v1865
        %1878 = vmatpush.bf16.msra.mxu0 %v1864
        %1879 = vmatmul.bf16.gmra.mxu0 %v1869
        %v1880 = vpop.f32.mrf.mxu0
        %v1881 = vadd.f32 %v1854, %v1880
        %v1882 = vpop.f32.mrf.mxu0
        %1883 = vdwg.mxu0
        %v1884 = vmul.f32 %v1881, 0.5
        %v1885 = vmul.f32 %v1881, 0.044715
        %v1886 = vmul.f32 %v1885, %v1881
        %v1887 = vmul.f32 %v1886, %v1881
        %v1888 = vadd.f32 %v1881, %v1887
        %v1889 = vmul.f32 %v1888, 0.7978846
        %v1890 = vtanh.pop %v1889
        %v1891 = vadd.f32 %v1890, 1.0
        %v1892 = vmul.f32 %v1884, %v1891
        %v1893 = vpack.c.bf16 %v1892, %v1892
        %v1894 = vld [vmem:[%s19] sm:$0xf]
        %v1895 = vld [vmem:[%s19 + $0x4] sm:$0xf]
        %v1896 = vld [vmem:[%s19 + $0x8] sm:$0xf]
        %v1897 = vld [vmem:[%s19 + $0xc] sm:$0xf]
        %v1898 = vld [vmem:[%s19 + $0x10] sm:$0xf]
        %v1899 = vld [vmem:[%s19 + $0x14] sm:$0xf]
        %v1900 = vld [vmem:[%s19 + $0x18] sm:$0xf]
        %v1901 = vld [vmem:[%s19 + $0x1c] sm:$0xf]
        %v1902 = vld [vmem:[%s19 + $0x20] sm:$0xf]
        %v1903 = vld [vmem:[%s19 + $0x24] sm:$0xf]
        %v1904 = vld [vmem:[%s19 + $0x28] sm:$0xf]
        %v1905 = vld [vmem:[%s19 + $0x2c] sm:$0xf]
        %v1906 = vld [vmem:[%s19 + $0x30] sm:$0xf]
        %v1907 = vld [vmem:[%s19 + $0x34] sm:$0xf]
        %v1908 = vld [vmem:[%s19 + $0x38] sm:$0xf]
        %v1909 = vld [vmem:[%s19 + $0x3c] sm:$0xf]
        %v1910 = vld [vmem:[%s20] sm:$0x1]
        %v1912 = vperm.slane %v1910, 0
        %v1930 = vunpack.c.l.b16 %v1894
        %v1931 = vunpack.c.l.b16 %v1895
        %v1932 = vunpack.c.l.b16 %v1896
        %v1933 = vunpack.c.l.b16 %v1897
        %v1934 = vunpack.c.l.b16 %v1898
        %v1935 = vunpack.c.l.b16 %v1899
        %v1936 = vunpack.c.l.b16 %v1900
        %v1937 = vunpack.c.l.b16 %v1901
        %v1938 = vunpack.c.l.b16 %v1902
        %v1939 = vunpack.c.l.b16 %v1903
        %v1940 = vunpack.c.l.b16 %v1904
        %v1941 = vunpack.c.l.b16 %v1905
        %v1942 = vunpack.c.l.b16 %v1906
        %v1943 = vunpack.c.l.b16 %v1907
        %v1944 = vunpack.c.l.b16 %v1908
        %v1945 = vunpack.c.l.b16 %v1909
        %v1946 = vpack.c.b16 %v1931, %v1930
        %v1947 = vpack.c.b16 %v1933, %v1932
        %v1948 = vpack.c.b16 %v1935, %v1934
        %v1949 = vpack.c.b16 %v1937, %v1936
        %v1950 = vpack.c.b16 %v1939, %v1938
        %v1951 = vpack.c.b16 %v1941, %v1940
        %v1952 = vpack.c.b16 %v1943, %v1942
        %v1953 = vpack.c.b16 %v1945, %v1944
        %1962 = vmatpush.bf16.msra.mxu0 %v1953
        %1963 = vmatpush.bf16.msra.mxu0 %v1952
        %1964 = vmatpush.bf16.msra.mxu0 %v1951
        %1965 = vmatpush.bf16.msra.mxu0 %v1950
        %1966 = vmatpush.bf16.msra.mxu0 %v1949
        %1967 = vmatpush.bf16.msra.mxu0 %v1948
        %1968 = vmatpush.bf16.msra.mxu0 %v1947
        %1969 = vmatpush.bf16.msra.mxu0 %v1946
        %1970 = vmatmul.bf16.gmra.mxu0 %v1893
        %v1971 = vpop.f32.mrf.mxu0
        %v1972 = vadd.f32 %v1912, %v1971
        %v1973 = vpop.f32.mrf.mxu0
        %1974 = vdwg.mxu0
        %v1975 = vperm.slane %v851, 5
        %v1976 = vmul.f32 %v1975, %v1972
        %v1977 = vadd.f32 %v1820, %v1976
        %1978 = vst.msk [vmem:[%s826] sm:$0xff] %vm1109, %v1977
        %s1979 = sand.u32 %s524, 1
        %s1980 = scalar_lea.sflag [#allocation8], %s1979
        %s1981 = sand.u32 %s524, 1
        %s1982 = smul.addr %s1981, 8
        %s1983 = scalar_lea.vmem [#allocation18], %s1982
        // Predicated region
        $region137: #{tpu_custom_call.1} parent=103 // pred_check
          %p1984 = pneg %p534
        $region138: #{tpu_custom_call.1} parent=103 // pred_check_branch
          %1986 = sbr.rel (%p1984) target = $region140
        $region139: #{tpu_custom_call.1} parent=103 // pred_region
          %1988 = vsyncadd %s1980, 0
          %s1989 = smul.addr %s43, 2
          %s1990 = sadd.s32 %s44, %s1989
          %s1991 = smul.addr %s1990, 8
          %s1992 = scalar_lea.hbm %s21, %s1991
          %s1994 = sshll.u32 %s1983, 4
          %s1995 = int_to_ptr.vmem [resolvable:$true] %s1994
          %s1996 = sshll.u32 %s1992, 4
          %s1997 = int_to_ptr.hbm [resolvable:$true] %s1996
          %1999 = dma.vmem_to_hbm [thread:$0]  %s1995, 128, %s1997, %s1980
        $region140: #{tpu_custom_call.1} parent=103 // pred_fallthru
          _
      $region104: #{tpu_custom_call.1} parent=5 // pred_fallthru
        _
      %p2000 = scmp.le.s32.totalorder 2, %s34
      // Predicated region
      $region141: #{tpu_custom_call.1} parent=5 // pred_check
        %p2001 = pneg %p2000
      $region142: #{tpu_custom_call.1} parent=5 // pred_check_branch
        %2003 = sbr.rel (%p2001) target = $region144
      $region143: #{tpu_custom_call.1} parent=5 // pred_region
        %s2004 = ssub.s32 %s34, 2
        // Predicated region
        $region145: #{tpu_custom_call.1} parent=143 // pred_check
          %p2005 = pneg %p540
        $region146: #{tpu_custom_call.1} parent=143 // pred_check_branch
          %2007 = sbr.rel (%p2005) target = $region148
        $region147: #{tpu_custom_call.1} parent=143 // pred_region
          %s2008 = sand.u32 %s525, 1
          %s2009 = scalar_lea.sflag [#allocation8], %s2008
          %s2010 = sand.u32 %s525, 1
          %s2011 = smul.addr %s2010, 8
          %s2012 = scalar_lea.vmem [#allocation18], %s2011
          %2014 = dma.done %s2009, 128
        $region148: #{tpu_custom_call.1} parent=143 // pred_fallthru
          _
      $region144: #{tpu_custom_call.1} parent=5 // pred_fallthru
        _
    $region6: #{tpu_custom_call.1} parent=1 // loop_footer
      %s38 = sadd.s32 1, %s34
    $region7: #{tpu_custom_call.1} parent=1 // loop_footer_branch
      %33 = sbr.rel target = $region3
    $region8: #{tpu_custom_call.1} parent=1 // loop_exit
      _
    %2015 = vsyncpa [#allocation7], 1
    %s2016 = scalar_lea.sflag [#allocation7], 1
    %2017 = vsyncpa %s2016, 1
    %2018 = vsyncpa [#allocation10], 1
    %2019 = vsyncpa [#allocation13], 1
    %2020 = vsyncpa [#allocation16], 1
    %2021 = vsyncpa [#allocation8], 1
    %s2022 = scalar_lea.sflag [#allocation8], 1
    %2023 = vsyncpa %s2022, 1

</llo_original>
